<compile_context>
chip_gen: v5e
topology: v5e:2x2
jax: 0.10.0
libtpu: 0.0.40
codegen_flags: <defaults>
</compile_context>

<pallas_src>
import functools
import numpy as np
import jax
import jax.numpy as jnp
from jax.experimental import pallas as pl
from jax.experimental.pallas import tpu as pltpu

# ----- hyper-parameters (mirror CONV.__init__ arguments) ---------------------
INPUT_DIM = 64
KERNEL_SIZE = 5
STRIDE = 1            # conv stride (kernel below assumes stride == 1)
MP_KERNEL = 2
MP_STRIDE = 2
OUTPUT_DIM = 8

BATCH = 256           # rows processed in the demo run
BLOCK_B = 128         # batch rows per grid step (full sublane utilization)

assert STRIDE == 1, "this synthetic kernel instantiates the module with conv stride=1"


def _out_len(lin, k, s):
    return (lin - k) // s + 1


LOUT1 = _out_len(INPUT_DIM, KERNEL_SIZE, STRIDE)   # 60
LP1 = _out_len(LOUT1, MP_KERNEL, MP_STRIDE)        # 30
LOUT2 = _out_len(LP1, KERNEL_SIZE, STRIDE)         # 26
LP2 = _out_len(LOUT2, MP_KERNEL, MP_STRIDE)        # 13
M1 = LOUT1 - MP_KERNEL + 1                         # 59 (pool1 shifted-max width)
M2 = LOUT2 - MP_KERNEL + 1                         # 25 (pool2 shifted-max width)

HIGH = jax.lax.Precision.HIGHEST

# packed scalar-parameter layout in SMEM: [w1(5), b1(1), w2(5), b2(1)]
W1_OFF = 0
B1_OFF = KERNEL_SIZE
W2_OFF = KERNEL_SIZE + 1
B2_OFF = 2 * KERNEL_SIZE + 1
N_SCALAR_PARAMS = 2 * KERNEL_SIZE + 2              # 12 floats


# ----- Pallas kernel: whole forward pass fused -------------------------------
def conv_forward_kernel(params_ref, x_ref, wfc_ref, out_ref):
    x = x_ref[...]                                  # (BLOCK_B, INPUT_DIM) f32

    # conv1 (stride=1) + bias + relu — scalar weights read from SMEM, no (1,1) broadcasts
    acc1 = params_ref[W1_OFF] * x[:, 0:LOUT1]
    for k in range(1, KERNEL_SIZE):
        acc1 = acc1 + params_ref[W1_OFF + k] * x[:, k:k + LOUT1]
    y1 = jnp.maximum(acc1 + params_ref[B1_OFF], 0.0)             # (B, 60)

    # max_pool1 (k=2, s=2): shifted max, then exact 0/1-selection matmul on the
    # (otherwise idle) MXU.  Selection matrix built in-kernel -> no DMA.
    m1 = jnp.maximum(y1[:, 0:M1], y1[:, 1:M1 + 1])               # (B, 59)
    rows = jax.lax.broadcasted_iota(jnp.int32, (M1, LP1), 0)
    cols = jax.lax.broadcasted_iota(jnp.int32, (M1, LP1), 1)
    s1 = (rows == MP_STRIDE * cols).astype(jnp.float32)          # (59, 30), exact 0/1
    p1 = jnp.dot(m1, s1, precision=HIGH,
                 preferred_element_type=jnp.float32)             # (B, 30)

    # TODO(synk): dropout(p=0.1) is inference-mode identity here.

    # conv2 (stride=1) + bias + relu
    acc2 = params_ref[W2_OFF] * p1[:, 0:LOUT2]
    for k in range(1, KERNEL_SIZE):
        acc2 = acc2 + params_ref[W2_OFF + k] * p1[:, k:k + LOUT2]
    y2 = jnp.maximum(acc2 + params_ref[B2_OFF], 0.0)             # (B, 26)

    # max_pool2 + fc3: the pool's 0/1 row selection is folded into the fc weight
    # at trace time (exact), and the fc bias rides along as the last row.
    m2 = jnp.maximum(y2[:, 0:M2], y2[:, 1:M2 + 1])               # (B, 25)
    w_aug = wfc_ref[...]                                         # (M2 + 1, OUTPUT_DIM)
    logits = jnp.dot(m2, w_aug[:M2, :], precision=HIGH,
                     preferred_element_type=jnp.float32) + w_aug[M2:M2 + 1, :]

    # sigmoid: exp on the EUP + exact divide (tile is only (BLOCK_B, 8); the exact
    # divide costs ~nothing and keeps the output within float32 of the reference).
    out_ref[...] = 1.0 / (1.0 + jnp.exp(-logits))


# ----- wrapper ----------------------------------------------------------------
@functools.partial(jax.jit, static_argnames=("block_b",))
def conv_forward(x_ncl, w1, b1, w2, b2, wfc, bfc, block_b=BLOCK_B):
    # x_ncl: (N, 1, INPUT_DIM) -- PyTorch NCL layout with C == 1
    x = x_ncl[:, 0, :].astype(jnp.float32)
    n = x.shape[0]
    n_pad = pl.cdiv(n, block_b) * block_b
    if n_pad != n:
        x = jnp.pad(x, ((0, n_pad - n), (0, 0)))

    # pack the 12 conv scalars into one SMEM-resident vector (one tiny DMA)
    params = jnp.concatenate([w1.reshape(-1), b1.reshape(-1),
                              w2.reshape(-1), b2.reshape(-1)]).astype(jnp.float32)

    # Fold max_pool2's 0/1 selection into the fc weight: rows 0,2,...,24 of the
    # fused matrix are wfc rows 0..12, odd rows are zero (exact row scatter).
    # Append the fc bias as an extra row -> one VMEM constant instead of three.
    wfc_fused = jnp.zeros((M2, OUTPUT_DIM), jnp.float32).at[::MP_STRIDE].set(wfc)
    wfc_aug = jnp.concatenate([wfc_fused, bfc.reshape(1, OUTPUT_DIM)], axis=0)

    out = pl.pallas_call(
        conv_forward_kernel,
        out_shape=jax.ShapeDtypeStruct((n_pad, OUTPUT_DIM), jnp.float32),
        grid=(n_pad // block_b,),
        in_specs=[
            pl.BlockSpec(memory_space=pltpu.MemorySpace.SMEM),       # packed conv scalars
            pl.BlockSpec((block_b, INPUT_DIM), lambda b: (b, 0)),    # x batch block
            pl.BlockSpec((M2 + 1, OUTPUT_DIM), lambda b: (0, 0)),    # fused fc weight+bias
        ],
        out_specs=pl.BlockSpec((block_b, OUTPUT_DIM), lambda b: (b, 0)),
        compiler_params=pltpu.CompilerParams(
            dimension_semantics=("parallel",)),                      # shards across TCs on v7x
    )(params, x, wfc_aug)
    return out[:n, None, :]    # back to (N, 1, OUTPUT_DIM) like the PyTorch module


# ----- deterministic parameter init (torch-like uniform fan-in) ----------------
def init_params(key):
    ks = jax.random.split(key, 6)
    bnd_c = 1.0 / np.sqrt(1 * KERNEL_SIZE)
    w1 = jax.random.uniform(ks[0], (1, KERNEL_SIZE), jnp.float32, -bnd_c, bnd_c)
    b1 = jax.random.uniform(ks[1], (1, 1), jnp.float32, -bnd_c, bnd_c)
    w2 = jax.random.uniform(ks[2], (1, KERNEL_SIZE), jnp.float32, -bnd_c, bnd_c)
    b2 = jax.random.uniform(ks[3], (1, 1), jnp.float32, -bnd_c, bnd_c)
    bnd_f = 1.0 / np.sqrt(LP2)
    # fc3.weight is (OUTPUT_DIM, LP2) in torch; store transposed (LP2, OUTPUT_DIM)
    wfc = jax.random.uniform(ks[4], (LP2, OUTPUT_DIM), jnp.float32, -bnd_f, bnd_f)
    bfc = jax.random.uniform(ks[5], (1, OUTPUT_DIM), jnp.float32, -bnd_f, bnd_f)
    return w1, b1, w2, b2, wfc, bfc


# ----- pure-JAX reference (eval-mode semantics of the PyTorch module) ----------
def reference(x_ncl, w1, b1, w2, b2, wfc, bfc):
    x = x_ncl[:, 0, :]

    def conv1d(v, w, b):
        lo = v.shape[1] - KERNEL_SIZE + 1
        out = sum(w[0, k] * v[:, k:k + lo] for k in range(KERNEL_SIZE))
        return out + b[0, 0]

    def maxpool(v):
        lo = (v.shape[1] - MP_KERNEL) // MP_STRIDE + 1
        cols = [v[:, MP_STRIDE * j:MP_STRIDE * j + MP_KERNEL].max(axis=1)
                for j in range(lo)]
        return jnp.stack(cols, axis=1)

    y = jax.nn.relu(conv1d(x, w1, b1))
    y = maxpool(y)
    y = jax.nn.relu(conv1d(y, w2, b2))
    y = maxpool(y)
    logits = jnp.dot(y, wfc, precision=HIGH) + bfc
    return jax.nn.sigmoid(logits)[:, None, :]


if __name__ == "__main__":
    key = jax.random.PRNGKey(0)
    k_x, k_p = jax.random.split(key)
    x = jax.random.normal(k_x, (BATCH, 1, INPUT_DIM), jnp.float32)
    params = init_params(k_p)

    out = jax.block_until_ready(conv_forward(x, *params))
    ref = reference(x, *params)

    assert out.shape == (BATCH, 1, OUTPUT_DIM), out.shape
    # conv / pooling / fc paths are bit-exact vs. reference (HIGHEST-precision 0/1
    # matmuls); the sigmoid now uses an exact divide, so the outputs agree to f32.
    np.testing.assert_allclose(np.asarray(out), np.asarray(ref),
                               rtol=1e-4, atol=1e-4)
    print("KERNEL_OK")
</pallas_src>

<mosaic_0001>
module attributes {stable_mosaic.version = 11 : i64} {
  func.func @conv_forward_kernel(%arg0: i32, %arg1: memref<12xf32, #tpu.memory_space<smem>>, %arg2: memref<128x64xf32, #tpu.memory_space<vmem>>, %arg3: memref<26x8xf32, #tpu.memory_space<vmem>>, %arg4: memref<128x8xf32, #tpu.memory_space<vmem>>) attributes {dimension_semantics = [#tpu.dimension_semantics<parallel>], iteration_bounds = array<i64: 2>, scalar_prefetch = 0 : i64, scratch_operands = 0 : i64, tpu.core_type = #tpu.core_type<tc>, window_params = [{transform_indices = @transform_0, window_bounds = array<i64: 12>}, {transform_indices = @transform_1, window_bounds = array<i64: 128, 64>}, {pipeline_mode = #tpu.pipeline_mode<synchronous>, transform_indices = @transform_2, window_bounds = array<i64: 26, 8>}, {transform_indices = @transform_3, window_bounds = array<i64: 128, 8>}]} {
    %c0 = arith.constant 0 : index
    %c0_0 = arith.constant 0 : index
    %0 = vector.load %arg2[%c0, %c0_0] : memref<128x64xf32, #tpu.memory_space<vmem>>, vector<128x64xf32>
    %c0_1 = arith.constant 0 : index
    %1 = memref.load %arg1[%c0_1] : memref<12xf32, #tpu.memory_space<smem>>
    %2 = vector.extract_strided_slice %0 {offsets = [0, 0], sizes = [128, 60], strides = [1, 1]} : vector<128x64xf32> to vector<128x60xf32>
    %3 = vector.broadcast %1 : f32 to vector<128x60xf32>
    %4 = arith.mulf %3, %2 : vector<128x60xf32>
    %c1 = arith.constant 1 : index
    %5 = memref.load %arg1[%c1] : memref<12xf32, #tpu.memory_space<smem>>
    %6 = vector.extract_strided_slice %0 {offsets = [0, 1], sizes = [128, 60], strides = [1, 1]} : vector<128x64xf32> to vector<128x60xf32>
    %7 = vector.broadcast %5 : f32 to vector<128x60xf32>
    %8 = arith.mulf %7, %6 : vector<128x60xf32>
    %9 = arith.addf %4, %8 : vector<128x60xf32>
    %c2 = arith.constant 2 : index
    %10 = memref.load %arg1[%c2] : memref<12xf32, #tpu.memory_space<smem>>
    %11 = vector.extract_strided_slice %0 {offsets = [0, 2], sizes = [128, 60], strides = [1, 1]} : vector<128x64xf32> to vector<128x60xf32>
    %12 = vector.broadcast %10 : f32 to vector<128x60xf32>
    %13 = arith.mulf %12, %11 : vector<128x60xf32>
    %14 = arith.addf %9, %13 : vector<128x60xf32>
    %c3 = arith.constant 3 : index
    %15 = memref.load %arg1[%c3] : memref<12xf32, #tpu.memory_space<smem>>
    %16 = vector.extract_strided_slice %0 {offsets = [0, 3], sizes = [128, 60], strides = [1, 1]} : vector<128x64xf32> to vector<128x60xf32>
    %17 = vector.broadcast %15 : f32 to vector<128x60xf32>
    %18 = arith.mulf %17, %16 : vector<128x60xf32>
    %19 = arith.addf %14, %18 : vector<128x60xf32>
    %c4 = arith.constant 4 : index
    %20 = memref.load %arg1[%c4] : memref<12xf32, #tpu.memory_space<smem>>
    %21 = vector.extract_strided_slice %0 {offsets = [0, 4], sizes = [128, 60], strides = [1, 1]} : vector<128x64xf32> to vector<128x60xf32>
    %22 = vector.broadcast %20 : f32 to vector<128x60xf32>
    %23 = arith.mulf %22, %21 : vector<128x60xf32>
    %24 = arith.addf %19, %23 : vector<128x60xf32>
    %c5 = arith.constant 5 : index
    %25 = memref.load %arg1[%c5] : memref<12xf32, #tpu.memory_space<smem>>
    %26 = vector.broadcast %25 : f32 to vector<128x60xf32>
    %27 = arith.addf %24, %26 : vector<128x60xf32>
    %cst = arith.constant 0.000000e+00 : f32
    %28 = vector.broadcast %cst : f32 to vector<128x60xf32>
    %29 = arith.maximumf %27, %28 : vector<128x60xf32>
    %30 = vector.extract_strided_slice %29 {offsets = [0, 0], sizes = [128, 59], strides = [1, 1]} : vector<128x60xf32> to vector<128x59xf32>
    %31 = vector.extract_strided_slice %29 {offsets = [0, 1], sizes = [128, 59], strides = [1, 1]} : vector<128x60xf32> to vector<128x59xf32>
    %32 = arith.maximumf %30, %31 : vector<128x59xf32>
    %33 = tpu.iota {dimensions = array<i32: 0>} : vector<59x30xi32>
    %34 = tpu.iota {dimensions = array<i32: 1>} : vector<59x30xi32>
    %c2_i32 = arith.constant 2 : i32
    %35 = vector.broadcast %c2_i32 : i32 to vector<59x30xi32>
    %36 = arith.muli %35, %34 : vector<59x30xi32>
    %37 = arith.cmpi eq, %33, %36 : vector<59x30xi32>
    %38 = arith.extui %37 : vector<59x30xi1> to vector<59x30xi32>
    %39 = arith.sitofp %38 : vector<59x30xi32> to vector<59x30xf32>
    %cst_2 = arith.constant dense<0.000000e+00> : vector<128x30xf32>
    %40 = tpu.matmul %32, %39, %cst_2 {dimension_numbers = #tpu.dot_dimension_numbers<[1], [0], [0], [1], [0, 0, 1, 1], [], []>, precision = #tpu.contract_precision<fp32>} : vector<128x59xf32>, vector<59x30xf32>, vector<128x30xf32> -> vector<128x30xf32>
    %c6 = arith.constant 6 : index
    %41 = memref.load %arg1[%c6] : memref<12xf32, #tpu.memory_space<smem>>
    %42 = vector.extract_strided_slice %40 {offsets = [0, 0], sizes = [128, 26], strides = [1, 1]} : vector<128x30xf32> to vector<128x26xf32>
    %43 = vector.broadcast %41 : f32 to vector<128x26xf32>
    %44 = arith.mulf %43, %42 : vector<128x26xf32>
    %c7 = arith.constant 7 : index
    %45 = memref.load %arg1[%c7] : memref<12xf32, #tpu.memory_space<smem>>
    %46 = vector.extract_strided_slice %40 {offsets = [0, 1], sizes = [128, 26], strides = [1, 1]} : vector<128x30xf32> to vector<128x26xf32>
    %47 = vector.broadcast %45 : f32 to vector<128x26xf32>
    %48 = arith.mulf %47, %46 : vector<128x26xf32>
    %49 = arith.addf %44, %48 : vector<128x26xf32>
    %c8 = arith.constant 8 : index
    %50 = memref.load %arg1[%c8] : memref<12xf32, #tpu.memory_space<smem>>
    %51 = vector.extract_strided_slice %40 {offsets = [0, 2], sizes = [128, 26], strides = [1, 1]} : vector<128x30xf32> to vector<128x26xf32>
    %52 = vector.broadcast %50 : f32 to vector<128x26xf32>
    %53 = arith.mulf %52, %51 : vector<128x26xf32>
    %54 = arith.addf %49, %53 : vector<128x26xf32>
    %c9 = arith.constant 9 : index
    %55 = memref.load %arg1[%c9] : memref<12xf32, #tpu.memory_space<smem>>
    %56 = vector.extract_strided_slice %40 {offsets = [0, 3], sizes = [128, 26], strides = [1, 1]} : vector<128x30xf32> to vector<128x26xf32>
    %57 = vector.broadcast %55 : f32 to vector<128x26xf32>
    %58 = arith.mulf %57, %56 : vector<128x26xf32>
    %59 = arith.addf %54, %58 : vector<128x26xf32>
    %c10 = arith.constant 10 : index
    %60 = memref.load %arg1[%c10] : memref<12xf32, #tpu.memory_space<smem>>
    %61 = vector.extract_strided_slice %40 {offsets = [0, 4], sizes = [128, 26], strides = [1, 1]} : vector<128x30xf32> to vector<128x26xf32>
    %62 = vector.broadcast %60 : f32 to vector<128x26xf32>
    %63 = arith.mulf %62, %61 : vector<128x26xf32>
    %64 = arith.addf %59, %63 : vector<128x26xf32>
    %c11 = arith.constant 11 : index
    %65 = memref.load %arg1[%c11] : memref<12xf32, #tpu.memory_space<smem>>
    %66 = vector.broadcast %65 : f32 to vector<128x26xf32>
    %67 = arith.addf %64, %66 : vector<128x26xf32>
    %cst_3 = arith.constant 0.000000e+00 : f32
    %68 = vector.broadcast %cst_3 : f32 to vector<128x26xf32>
    %69 = arith.maximumf %67, %68 : vector<128x26xf32>
    %70 = vector.extract_strided_slice %69 {offsets = [0, 0], sizes = [128, 25], strides = [1, 1]} : vector<128x26xf32> to vector<128x25xf32>
    %71 = vector.extract_strided_slice %69 {offsets = [0, 1], sizes = [128, 25], strides = [1, 1]} : vector<128x26xf32> to vector<128x25xf32>
    %72 = arith.maximumf %70, %71 : vector<128x25xf32>
    %c0_4 = arith.constant 0 : index
    %c0_5 = arith.constant 0 : index
    %73 = vector.load %arg3[%c0_4, %c0_5] : memref<26x8xf32, #tpu.memory_space<vmem>>, vector<26x8xf32>
    %74 = vector.extract_strided_slice %73 {offsets = [0, 0], sizes = [25, 8], strides = [1, 1]} : vector<26x8xf32> to vector<25x8xf32>
    %cst_6 = arith.constant dense<0.000000e+00> : vector<128x8xf32>
    %75 = tpu.matmul %72, %74, %cst_6 {dimension_numbers = #tpu.dot_dimension_numbers<[1], [0], [0], [1], [0, 0, 1, 1], [], []>, precision = #tpu.contract_precision<fp32>} : vector<128x25xf32>, vector<25x8xf32>, vector<128x8xf32> -> vector<128x8xf32>
    %76 = vector.extract_strided_slice %73 {offsets = [25, 0], sizes = [1, 8], strides = [1, 1]} : vector<26x8xf32> to vector<1x8xf32>
    %77 = vector.broadcast %76 : vector<1x8xf32> to vector<128x8xf32>
    %78 = arith.addf %75, %77 : vector<128x8xf32>
    %cst_7 = arith.constant 0.000000e+00 : f32
    %79 = vector.broadcast %cst_7 : f32 to vector<128x8xf32>
    %80 = arith.subf %79, %78 : vector<128x8xf32>
    %81 = math.exp %80 : vector<128x8xf32>
    %cst_8 = arith.constant 1.000000e+00 : f32
    %82 = vector.broadcast %cst_8 : f32 to vector<128x8xf32>
    %83 = arith.addf %82, %81 : vector<128x8xf32>
    %cst_9 = arith.constant 1.000000e+00 : f32
    %84 = vector.broadcast %cst_9 : f32 to vector<128x8xf32>
    %85 = arith.divf %84, %83 : vector<128x8xf32>
    %c0_10 = arith.constant 0 : index
    %c0_11 = arith.constant 0 : index
    %86 = vector.load %arg4[%c0_10, %c0_11] : memref<128x8xf32, #tpu.memory_space<vmem>>, vector<128x8xf32>
    tpu.vector_store %arg4[%c0_10, %c0_11], %85 {strides = array<i32>} : memref<128x8xf32, #tpu.memory_space<vmem>>, vector<128x8xf32>,
    return
  }
  func.func @transform_0(%arg0: i32) -> i32 {
    %c0_i32 = arith.constant 0 : i32
    %c0_i32_0 = arith.constant 0 : i32
    return %c0_i32 : i32
  }
  func.func @transform_1(%arg0: i32) -> (i32, i32) {
    %c0_i32 = arith.constant 0 : i32
    %c0_i32_0 = arith.constant 0 : i32
    return %arg0, %c0_i32 : i32, i32
  }
  func.func @transform_2(%arg0: i32) -> (i32, i32) {
    %c0_i32 = arith.constant 0 : i32
    %c0_i32_0 = arith.constant 0 : i32
    %c0_i32_1 = arith.constant 0 : i32
    return %c0_i32, %c0_i32_0 : i32, i32
  }
  func.func @transform_3(%arg0: i32) -> (i32, i32) {
    %c0_i32 = arith.constant 0 : i32
    %c0_i32_0 = arith.constant 0 : i32
    return %arg0, %c0_i32 : i32, i32
  }
}

</mosaic_0001>

<llo_original>
// kernel: conv_forward.1
$region0: #{conv_forward.1}
  #allocation0 [shape = 'u32[]', space=smem, size = 0x4, offset = 0x4, fixed_abs, tag = 'smem constant byte address 0x4 - core index']
  #allocation1 [shape = 'u32[72,128]{1,0:T(1,128)}', space=vmem, size = 0x9000, scoped, tag = 'internal scratch']
  %s0 = inlined_call_operand.vmem [shape: f32[12], index: 0, kind: input, shape index: {}]
  %s1 = inlined_call_operand.vmem [shape: f32[256,64], index: 1, kind: input, shape index: {}]
  %s2 = inlined_call_operand.vmem [shape: f32[26,8], index: 2, kind: input, shape index: {}]
  %s3 = inlined_call_operand.vmem [shape: f32[256,8], index: 3, kind: output, shape index: {}]
  %s4 = sld [smem:[#allocation0]]
  $region49: #{conv_forward.1} parent=0
    _
  %s6 = ssub.s32 1, %s4
  %s7 = scalar_select 0, %s6, %s4
  $region1: #{conv_forward.1} parent=0
    #allocation2 [shape = 'u8[512]{0}', space=smem, size = 0x200, scoped, tag = 'input window, operand 0, single buffered']
    #allocation3 [shape = 's32[2]{0}', space=sflag, size = 0x8, scoped, tag = 'scoped memory for conv_forward.1']
    %8 = vsyncpa [#allocation3], 0
    loop: start=0, step=1, limit=4
    $region2: #{conv_forward.1} parent=1 // loop_pre_header
      _
    $region3: #{conv_forward.1} parent=1 // loop_header
      %s10 = sphi 0, %s14
      %p11 = scmp.ge.s32.totalorder %s10, 4
      %s18 = sphi 0, %s18
      %s20 = sphi 0, %s18
      %s21 = sphi 0, %s20
      %s35 = sphi 0, %s21
      %s41 = sphi 0, %s43
      %s44 = sphi 0, %s41
      %s45 = sphi 0, %s44
      %s61 = sphi 0, %s45
      %s65 = sphi 0, %s65
      %s67 = sphi 0, %s65
      %s68 = sphi 0, %s67
      %s82 = sphi 0, %s68
      %s88 = sphi 0, %s90
      %s91 = sphi 0, %s88
      %s92 = sphi 0, %s91
      %s108 = sphi 0, %s92
    $region4: #{conv_forward.1} parent=1 // loop_header_branch
      %13 = sbr.rel (%p11) target = $region8
    $region5: #{conv_forward.1} parent=1 // loop_body
      %s15 = ssub.s32 %s10, 1
      %s16 = ssub.s32 %s10, 2
      %s17 = sadd.s32 %s10, 1
      %s19 = sadd.s32 %s18, 1
      %p22 = scmp.eq.s32.totalorder %s10, 1
      %p23 = scmp.ne.s32.totalorder %s18, %s20
      %p24 = scmp.eq.s32.totalorder %s10, 0
      %p25 = por %p23, %p24
      %p26 = scmp.ne.s32.totalorder %s18, %s20
      %p27 = scmp.eq.s32.totalorder %s15, 1
      %p28 = por %p26, %p27
      %p29 = scmp.ne.s32.totalorder %s20, %s21
      %p30 = scmp.eq.s32.totalorder %s15, 0
      %p31 = por %p29, %p30
      %p32 = scmp.ne.s32.totalorder %s20, %s21
      %p33 = scmp.eq.s32.totalorder %s16, 1
      %p34 = por %p32, %p33
      %p36 = scmp.ne.s32.totalorder %s21, %s35
      %p37 = scmp.eq.s32.totalorder %s16, 0
      %p38 = por %p36, %p37
      %s39 = ssub.s32 %s10, %s17
      %p40 = scmp.eq.s32.totalorder %s39, 0
      %s42 = sadd.s32 %s41, 1
      %s43 = scalar_select %p40, %s41, %s42
      %p46 = pneg %p40
      %p47 = scmp.eq.s32.totalorder %s10, 1
      %p48 = por %p46, %p47
      %p49 = scmp.ne.s32.totalorder %s41, %s44
      %p50 = scmp.eq.s32.totalorder %s10, 0
      %p51 = por %p49, %p50
      %p52 = scmp.ne.s32.totalorder %s41, %s44
      %p53 = scmp.eq.s32.totalorder %s15, 1
      %p54 = por %p52, %p53
      %p55 = scmp.ne.s32.totalorder %s44, %s45
      %p56 = scmp.eq.s32.totalorder %s15, 0
      %p57 = por %p55, %p56
      %p58 = scmp.ne.s32.totalorder %s44, %s45
      %p59 = scmp.eq.s32.totalorder %s16, 1
      %p60 = por %p58, %p59
      %p62 = scmp.ne.s32.totalorder %s45, %s61
      %p63 = scmp.eq.s32.totalorder %s16, 0
      %p64 = por %p62, %p63
      %s66 = sadd.s32 %s65, 1
      %p69 = scmp.eq.s32.totalorder %s10, 1
      %p70 = scmp.ne.s32.totalorder %s65, %s67
      %p71 = scmp.eq.s32.totalorder %s10, 0
      %p72 = por %p70, %p71
      %p73 = scmp.ne.s32.totalorder %s65, %s67
      %p74 = scmp.eq.s32.totalorder %s15, 1
      %p75 = por %p73, %p74
      %p76 = scmp.ne.s32.totalorder %s67, %s68
      %p77 = scmp.eq.s32.totalorder %s15, 0
      %p78 = por %p76, %p77
      %p79 = scmp.ne.s32.totalorder %s67, %s68
      %p80 = scmp.eq.s32.totalorder %s16, 1
      %p81 = por %p79, %p80
      %p83 = scmp.ne.s32.totalorder %s68, %s82
      %p84 = scmp.eq.s32.totalorder %s16, 0
      %p85 = por %p83, %p84
      %s86 = ssub.s32 %s10, %s17
      %p87 = scmp.eq.s32.totalorder %s86, 0
      %s89 = sadd.s32 %s88, 1
      %s90 = scalar_select %p87, %s88, %s89
      %p93 = pneg %p87
      %p94 = scmp.eq.s32.totalorder %s10, 1
      %p95 = por %p93, %p94
      %p96 = scmp.ne.s32.totalorder %s88, %s91
      %p97 = scmp.eq.s32.totalorder %s10, 0
      %p98 = por %p96, %p97
      %p99 = scmp.ne.s32.totalorder %s88, %s91
      %p100 = scmp.eq.s32.totalorder %s15, 1
      %p101 = por %p99, %p100
      %p102 = scmp.ne.s32.totalorder %s91, %s92
      %p103 = scmp.eq.s32.totalorder %s15, 0
      %p104 = por %p102, %p103
      %p105 = scmp.ne.s32.totalorder %s91, %s92
      %p106 = scmp.eq.s32.totalorder %s16, 1
      %p107 = por %p105, %p106
      %p109 = scmp.ne.s32.totalorder %s92, %s108
      %p110 = scmp.eq.s32.totalorder %s16, 0
      %p111 = por %p109, %p110
      %p112 = scmp.le.s32.totalorder 1, %s10
      %p113 = scmp.lt.s32.totalorder %s10, 3
      %p114 = pnand %p112, %p113
      %p115 = pneg %p114
      // Predicated region
      $region9: #{conv_forward.1} parent=5 // pred_check
        _
      $region10: #{conv_forward.1} parent=5 // pred_check_branch
        %117 = sbr.rel (%p114) target = $region12
      $region11: #{conv_forward.1} parent=5 // pred_region
        %s118 = ssub.s32 %s10, 1
        // Predicated region
        $region13: #{conv_forward.1} parent=11 // pred_check
          %p119 = pneg %p31
        $region14: #{conv_forward.1} parent=11 // pred_check_branch
          %121 = sbr.rel (%p119) target = $region16
        $region15: #{conv_forward.1} parent=11 // pred_region
          %123 = vsyncadd [#allocation3], 0
          %s125 = sshll.u32 %s0, 4
          %s126 = int_to_ptr.vmem [resolvable:$true] %s125
          %128 = dma.vmem_to_smem %s126, 16, [#allocation2], [#allocation3]
        $region16: #{conv_forward.1} parent=11 // pred_fallthru
          _
        // Predicated region
        $region17: #{conv_forward.1} parent=11 // pred_check
          %p129 = pneg %p78
        $region18: #{conv_forward.1} parent=11 // pred_check_branch
          %131 = sbr.rel (%p129) target = $region20
        $region19: #{conv_forward.1} parent=11 // pred_region
          _
        $region20: #{conv_forward.1} parent=11 // pred_fallthru
          _
      $region12: #{conv_forward.1} parent=5 // pred_fallthru
        _
      %p132 = scmp.lt.s32.totalorder %s10, 2
      // Predicated region
      $region21: #{conv_forward.1} parent=5 // pred_check
        %p133 = pneg %p132
      $region22: #{conv_forward.1} parent=5 // pred_check_branch
        %135 = sbr.rel (%p133) target = $region24
      $region23: #{conv_forward.1} parent=5 // pred_region
        // Predicated region
        $region25: #{conv_forward.1} parent=23 // pred_check
          %p136 = pneg %p51
        $region26: #{conv_forward.1} parent=23 // pred_check_branch
          %138 = sbr.rel (%p136) target = $region28
        $region27: #{conv_forward.1} parent=23 // pred_region
          %s139 = smul.u32 16, %s10
          %p140 = scmp.lt.s32.totalorder %s139, 31
          %s141 = scalar_select %p140, %s139, 31
          %s142 = smul.addr %s141, 8
          %s143 = scalar_lea.vmem %s1, %s142
          %s144 = smul.u32 16, %s10
        $region28: #{conv_forward.1} parent=23 // pred_fallthru
          _
      $region24: #{conv_forward.1} parent=5 // pred_fallthru
        _
      %p145 = scmp.le.s32.totalorder 1, %s10
      %p146 = scmp.lt.s32.totalorder %s10, 3
      %p147 = pnand %p145, %p146
      %p148 = pneg %p147
      // Predicated region
      $region29: #{conv_forward.1} parent=5 // pred_check
        _
      $region30: #{conv_forward.1} parent=5 // pred_check_branch
        %150 = sbr.rel (%p147) target = $region32
      $region31: #{conv_forward.1} parent=5 // pred_region
        %s151 = ssub.s32 %s10, 1
        // Predicated region
        $region33: #{conv_forward.1} parent=31 // pred_check
          %p152 = pneg %p31
        $region34: #{conv_forward.1} parent=31 // pred_check_branch
          %154 = sbr.rel (%p152) target = $region36
        $region35: #{conv_forward.1} parent=31 // pred_region
          %156 = dma.done [#allocation3], 16
        $region36: #{conv_forward.1} parent=31 // pred_fallthru
          _
        %157 = sfence
        %p158 = pneg %p31
        %p159 = pneg %p28
        %s160 = smul.u32 16, %s15
        %p161 = scmp.lt.s32.totalorder %s160, 31
        %s162 = scalar_select %p161, %s160, 31
        %s163 = smul.addr %s162, 8
        %s164 = scalar_lea.vmem %s1, %s163
        %p165 = pneg %p57
        %p166 = pneg %p54
        %p167 = pneg %p78
        %p168 = pneg %p75
        %p169 = pneg %p104
        %p170 = pneg %p101
        %s171 = smul.u32 16, %s15
        %p172 = scmp.lt.s32.totalorder %s171, 31
        %s173 = scalar_select %p172, %s171, 31
        %s174 = smul.addr %s173, 8
        %s175 = scalar_lea.vmem %s3, %s174
        %s176 = smul.u32 16, %s15
        %p177 = scmp.lt.s32.totalorder %s176, 31
        %s178 = scalar_select %p177, %s176, 31
        %s179 = smul.addr %s178, 8
        %s180 = scalar_lea.vmem %s1, %s179
        %s181 = smul.u32 16, %s15
        %s182 = smul.u32 16, %s15
        %p183 = scmp.lt.s32.totalorder %s182, 31
        %s184 = scalar_select %p183, %s182, 31
        %s185 = smul.addr %s184, 8
        %s186 = scalar_lea.vmem %s3, %s185
        %s187 = smul.u32 16, %s15
        %v188 = vld [vmem:[%s180] sm:$0xff]
        %v189 = vld [vmem:[%s180 + $0x8] sm:$0xff]
        %v190 = vld [vmem:[%s180 + $0x10] sm:$0xff]
        %v191 = vld [vmem:[%s180 + $0x18] sm:$0xff]
        %v192 = vld [vmem:[%s180 + $0x20] sm:$0xff]
        %v193 = vld [vmem:[%s180 + $0x28] sm:$0xff]
        %v194 = vld [vmem:[%s180 + $0x30] sm:$0xff]
        %v195 = vld [vmem:[%s180 + $0x38] sm:$0xff]
        %v196 = vld [vmem:[%s180 + $0x40] sm:$0xff]
        %v197 = vld [vmem:[%s180 + $0x48] sm:$0xff]
        %v198 = vld [vmem:[%s180 + $0x50] sm:$0xff]
        %v199 = vld [vmem:[%s180 + $0x58] sm:$0xff]
        %v200 = vld [vmem:[%s180 + $0x60] sm:$0xff]
        %v201 = vld [vmem:[%s180 + $0x68] sm:$0xff]
        %v202 = vld [vmem:[%s180 + $0x70] sm:$0xff]
        %v203 = vld [vmem:[%s180 + $0x78] sm:$0xff]
        %s204 = sld [smem:[#allocation2]]
        %v205 = vstv %s204
        %v206 = vmul.f32 %v205, %v188
        %v207 = vmul.f32 %v205, %v189
        %v208 = vmul.f32 %v205, %v190
        %v209 = vmul.f32 %v205, %v191
        %v210 = vmul.f32 %v205, %v192
        %v211 = vmul.f32 %v205, %v193
        %v212 = vmul.f32 %v205, %v194
        %v213 = vmul.f32 %v205, %v195
        %v214 = vmul.f32 %v205, %v196
        %v215 = vmul.f32 %v205, %v197
        %v216 = vmul.f32 %v205, %v198
        %v217 = vmul.f32 %v205, %v199
        %v218 = vmul.f32 %v205, %v200
        %v219 = vmul.f32 %v205, %v201
        %v220 = vmul.f32 %v205, %v202
        %v221 = vmul.f32 %v205, %v203
        %s222 = sld [smem:[#allocation2 + $0x1]]
        %v223 = vstv %s222
        %v224 = vmul.f32 %v223, %v188
        %v225 = vmul.f32 %v223, %v189
        %v226 = vmul.f32 %v223, %v190
        %v227 = vmul.f32 %v223, %v191
        %v228 = vmul.f32 %v223, %v192
        %v229 = vmul.f32 %v223, %v193
        %v230 = vmul.f32 %v223, %v194
        %v231 = vmul.f32 %v223, %v195
        %v232 = vmul.f32 %v223, %v196
        %v233 = vmul.f32 %v223, %v197
        %v234 = vmul.f32 %v223, %v198
        %v235 = vmul.f32 %v223, %v199
        %v236 = vmul.f32 %v223, %v200
        %v237 = vmul.f32 %v223, %v201
        %v238 = vmul.f32 %v223, %v202
        %v239 = vmul.f32 %v223, %v203
        %256 = vrot.lane.b32.xlu0 %v224, 127
        %v257 = vpop.permute.xlu0 %256
        %258 = vrot.lane.b32.xlu0 %v225, 127
        %v259 = vpop.permute.xlu0 %258
        %260 = vrot.lane.b32.xlu0 %v226, 127
        %v261 = vpop.permute.xlu0 %260
        %262 = vrot.lane.b32.xlu0 %v227, 127
        %v263 = vpop.permute.xlu0 %262
        %264 = vrot.lane.b32.xlu0 %v228, 127
        %v265 = vpop.permute.xlu0 %264
        %266 = vrot.lane.b32.xlu0 %v229, 127
        %v267 = vpop.permute.xlu0 %266
        %268 = vrot.lane.b32.xlu0 %v230, 127
        %v269 = vpop.permute.xlu0 %268
        %270 = vrot.lane.b32.xlu0 %v231, 127
        %v271 = vpop.permute.xlu0 %270
        %272 = vrot.lane.b32.xlu0 %v232, 127
        %v273 = vpop.permute.xlu0 %272
        %274 = vrot.lane.b32.xlu0 %v233, 127
        %v275 = vpop.permute.xlu0 %274
        %276 = vrot.lane.b32.xlu0 %v234, 127
        %v277 = vpop.permute.xlu0 %276
        %278 = vrot.lane.b32.xlu0 %v235, 127
        %v279 = vpop.permute.xlu0 %278
        %280 = vrot.lane.b32.xlu0 %v236, 127
        %v281 = vpop.permute.xlu0 %280
        %282 = vrot.lane.b32.xlu0 %v237, 127
        %v283 = vpop.permute.xlu0 %282
        %284 = vrot.lane.b32.xlu0 %v238, 127
        %v285 = vpop.permute.xlu0 %284
        %286 = vrot.lane.b32.xlu0 %v239, 127
        %v287 = vpop.permute.xlu0 %286
        %v304 = vadd.f32 %v206, %v257
        %v305 = vadd.f32 %v207, %v259
        %v306 = vadd.f32 %v208, %v261
        %v307 = vadd.f32 %v209, %v263
        %v308 = vadd.f32 %v210, %v265
        %v309 = vadd.f32 %v211, %v267
        %v310 = vadd.f32 %v212, %v269
        %v311 = vadd.f32 %v213, %v271
        %v312 = vadd.f32 %v214, %v273
        %v313 = vadd.f32 %v215, %v275
        %v314 = vadd.f32 %v216, %v277
        %v315 = vadd.f32 %v217, %v279
        %v316 = vadd.f32 %v218, %v281
        %v317 = vadd.f32 %v219, %v283
        %v318 = vadd.f32 %v220, %v285
        %v319 = vadd.f32 %v221, %v287
        %s320 = sld [smem:[#allocation2 + $0x2]]
        %v321 = vstv %s320
        %v322 = vmul.f32 %v321, %v188
        %v323 = vmul.f32 %v321, %v189
        %v324 = vmul.f32 %v321, %v190
        %v325 = vmul.f32 %v321, %v191
        %v326 = vmul.f32 %v321, %v192
        %v327 = vmul.f32 %v321, %v193
        %v328 = vmul.f32 %v321, %v194
        %v329 = vmul.f32 %v321, %v195
        %v330 = vmul.f32 %v321, %v196
        %v331 = vmul.f32 %v321, %v197
        %v332 = vmul.f32 %v321, %v198
        %v333 = vmul.f32 %v321, %v199
        %v334 = vmul.f32 %v321, %v200
        %v335 = vmul.f32 %v321, %v201
        %v336 = vmul.f32 %v321, %v202
        %v337 = vmul.f32 %v321, %v203
        %354 = vrot.lane.b32.xlu0 %v322, 126
        %v355 = vpop.permute.xlu0 %354
        %356 = vrot.lane.b32.xlu0 %v323, 126
        %v357 = vpop.permute.xlu0 %356
        %358 = vrot.lane.b32.xlu0 %v324, 126
        %v359 = vpop.permute.xlu0 %358
        %360 = vrot.lane.b32.xlu0 %v325, 126
        %v361 = vpop.permute.xlu0 %360
        %362 = vrot.lane.b32.xlu0 %v326, 126
        %v363 = vpop.permute.xlu0 %362
        %364 = vrot.lane.b32.xlu0 %v327, 126
        %v365 = vpop.permute.xlu0 %364
        %366 = vrot.lane.b32.xlu0 %v328, 126
        %v367 = vpop.permute.xlu0 %366
        %368 = vrot.lane.b32.xlu0 %v329, 126
        %v369 = vpop.permute.xlu0 %368
        %370 = vrot.lane.b32.xlu0 %v330, 126
        %v371 = vpop.permute.xlu0 %370
        %372 = vrot.lane.b32.xlu0 %v331, 126
        %v373 = vpop.permute.xlu0 %372
        %374 = vrot.lane.b32.xlu0 %v332, 126
        %v375 = vpop.permute.xlu0 %374
        %376 = vrot.lane.b32.xlu0 %v333, 126
        %v377 = vpop.permute.xlu0 %376
        %378 = vrot.lane.b32.xlu0 %v334, 126
        %v379 = vpop.permute.xlu0 %378
        %380 = vrot.lane.b32.xlu0 %v335, 126
        %v381 = vpop.permute.xlu0 %380
        %382 = vrot.lane.b32.xlu0 %v336, 126
        %v383 = vpop.permute.xlu0 %382
        %384 = vrot.lane.b32.xlu0 %v337, 126
        %v385 = vpop.permute.xlu0 %384
        %v402 = vadd.f32 %v304, %v355
        %v403 = vadd.f32 %v305, %v357
        %v404 = vadd.f32 %v306, %v359
        %v405 = vadd.f32 %v307, %v361
        %v406 = vadd.f32 %v308, %v363
        %v407 = vadd.f32 %v309, %v365
        %v408 = vadd.f32 %v310, %v367
        %v409 = vadd.f32 %v311, %v369
        %v410 = vadd.f32 %v312, %v371
        %v411 = vadd.f32 %v313, %v373
        %v412 = vadd.f32 %v314, %v375
        %v413 = vadd.f32 %v315, %v377
        %v414 = vadd.f32 %v316, %v379
        %v415 = vadd.f32 %v317, %v381
        %v416 = vadd.f32 %v318, %v383
        %v417 = vadd.f32 %v319, %v385
        %s418 = sld [smem:[#allocation2 + $0x3]]
        %v419 = vstv %s418
        %v420 = vmul.f32 %v419, %v188
        %v421 = vmul.f32 %v419, %v189
        %v422 = vmul.f32 %v419, %v190
        %v423 = vmul.f32 %v419, %v191
        %v424 = vmul.f32 %v419, %v192
        %v425 = vmul.f32 %v419, %v193
        %v426 = vmul.f32 %v419, %v194
        %v427 = vmul.f32 %v419, %v195
        %v428 = vmul.f32 %v419, %v196
        %v429 = vmul.f32 %v419, %v197
        %v430 = vmul.f32 %v419, %v198
        %v431 = vmul.f32 %v419, %v199
        %v432 = vmul.f32 %v419, %v200
        %v433 = vmul.f32 %v419, %v201
        %v434 = vmul.f32 %v419, %v202
        %v435 = vmul.f32 %v419, %v203
        %452 = vrot.lane.b32.xlu0 %v420, 125
        %v453 = vpop.permute.xlu0 %452
        %454 = vrot.lane.b32.xlu0 %v421, 125
        %v455 = vpop.permute.xlu0 %454
        %456 = vrot.lane.b32.xlu0 %v422, 125
        %v457 = vpop.permute.xlu0 %456
        %458 = vrot.lane.b32.xlu0 %v423, 125
        %v459 = vpop.permute.xlu0 %458
        %460 = vrot.lane.b32.xlu0 %v424, 125
        %v461 = vpop.permute.xlu0 %460
        %462 = vrot.lane.b32.xlu0 %v425, 125
        %v463 = vpop.permute.xlu0 %462
        %464 = vrot.lane.b32.xlu0 %v426, 125
        %v465 = vpop.permute.xlu0 %464
        %466 = vrot.lane.b32.xlu0 %v427, 125
        %v467 = vpop.permute.xlu0 %466
        %468 = vrot.lane.b32.xlu0 %v428, 125
        %v469 = vpop.permute.xlu0 %468
        %470 = vrot.lane.b32.xlu0 %v429, 125
        %v471 = vpop.permute.xlu0 %470
        %472 = vrot.lane.b32.xlu0 %v430, 125
        %v473 = vpop.permute.xlu0 %472
        %474 = vrot.lane.b32.xlu0 %v431, 125
        %v475 = vpop.permute.xlu0 %474
        %476 = vrot.lane.b32.xlu0 %v432, 125
        %v477 = vpop.permute.xlu0 %476
        %478 = vrot.lane.b32.xlu0 %v433, 125
        %v479 = vpop.permute.xlu0 %478
        %480 = vrot.lane.b32.xlu0 %v434, 125
        %v481 = vpop.permute.xlu0 %480
        %482 = vrot.lane.b32.xlu0 %v435, 125
        %v483 = vpop.permute.xlu0 %482
        %v500 = vadd.f32 %v402, %v453
        %v501 = vadd.f32 %v403, %v455
        %v502 = vadd.f32 %v404, %v457
        %v503 = vadd.f32 %v405, %v459
        %v504 = vadd.f32 %v406, %v461
        %v505 = vadd.f32 %v407, %v463
        %v506 = vadd.f32 %v408, %v465
        %v507 = vadd.f32 %v409, %v467
        %v508 = vadd.f32 %v410, %v469
        %v509 = vadd.f32 %v411, %v471
        %v510 = vadd.f32 %v412, %v473
        %v511 = vadd.f32 %v413, %v475
        %v512 = vadd.f32 %v414, %v477
        %v513 = vadd.f32 %v415, %v479
        %v514 = vadd.f32 %v416, %v481
        %v515 = vadd.f32 %v417, %v483
        %s516 = sld [smem:[#allocation2 + $0x4]]
        %v517 = vstv %s516
        %v518 = vmul.f32 %v517, %v188
        %v519 = vmul.f32 %v517, %v189
        %v520 = vmul.f32 %v517, %v190
        %v521 = vmul.f32 %v517, %v191
        %v522 = vmul.f32 %v517, %v192
        %v523 = vmul.f32 %v517, %v193
        %v524 = vmul.f32 %v517, %v194
        %v525 = vmul.f32 %v517, %v195
        %v526 = vmul.f32 %v517, %v196
        %v527 = vmul.f32 %v517, %v197
        %v528 = vmul.f32 %v517, %v198
        %v529 = vmul.f32 %v517, %v199
        %v530 = vmul.f32 %v517, %v200
        %v531 = vmul.f32 %v517, %v201
        %v532 = vmul.f32 %v517, %v202
        %v533 = vmul.f32 %v517, %v203
        %550 = vrot.lane.b32.xlu0 %v518, 124
        %v551 = vpop.permute.xlu0 %550
        %552 = vrot.lane.b32.xlu0 %v519, 124
        %v553 = vpop.permute.xlu0 %552
        %554 = vrot.lane.b32.xlu0 %v520, 124
        %v555 = vpop.permute.xlu0 %554
        %556 = vrot.lane.b32.xlu0 %v521, 124
        %v557 = vpop.permute.xlu0 %556
        %558 = vrot.lane.b32.xlu0 %v522, 124
        %v559 = vpop.permute.xlu0 %558
        %560 = vrot.lane.b32.xlu0 %v523, 124
        %v561 = vpop.permute.xlu0 %560
        %562 = vrot.lane.b32.xlu0 %v524, 124
        %v563 = vpop.permute.xlu0 %562
        %564 = vrot.lane.b32.xlu0 %v525, 124
        %v565 = vpop.permute.xlu0 %564
        %566 = vrot.lane.b32.xlu0 %v526, 124
        %v567 = vpop.permute.xlu0 %566
        %568 = vrot.lane.b32.xlu0 %v527, 124
        %v569 = vpop.permute.xlu0 %568
        %570 = vrot.lane.b32.xlu0 %v528, 124
        %v571 = vpop.permute.xlu0 %570
        %572 = vrot.lane.b32.xlu0 %v529, 124
        %v573 = vpop.permute.xlu0 %572
        %574 = vrot.lane.b32.xlu0 %v530, 124
        %v575 = vpop.permute.xlu0 %574
        %576 = vrot.lane.b32.xlu0 %v531, 124
        %v577 = vpop.permute.xlu0 %576
        %578 = vrot.lane.b32.xlu0 %v532, 124
        %v579 = vpop.permute.xlu0 %578
        %580 = vrot.lane.b32.xlu0 %v533, 124
        %v581 = vpop.permute.xlu0 %580
        %v598 = vadd.f32 %v500, %v551
        %v599 = vadd.f32 %v501, %v553
        %v600 = vadd.f32 %v502, %v555
        %v601 = vadd.f32 %v503, %v557
        %v602 = vadd.f32 %v504, %v559
        %v603 = vadd.f32 %v505, %v561
        %v604 = vadd.f32 %v506, %v563
        %v605 = vadd.f32 %v507, %v565
        %v606 = vadd.f32 %v508, %v567
        %v607 = vadd.f32 %v509, %v569
        %v608 = vadd.f32 %v510, %v571
        %v609 = vadd.f32 %v511, %v573
        %v610 = vadd.f32 %v512, %v575
        %v611 = vadd.f32 %v513, %v577
        %v612 = vadd.f32 %v514, %v579
        %v613 = vadd.f32 %v515, %v581
        %s614 = sld [smem:[#allocation2 + $0x5]]
        %v615 = vstv %s614
        %v616 = vadd.f32 %v598, %v615
        %v617 = vadd.f32 %v599, %v615
        %v618 = vadd.f32 %v600, %v615
        %v619 = vadd.f32 %v601, %v615
        %v620 = vadd.f32 %v602, %v615
        %v621 = vadd.f32 %v603, %v615
        %v622 = vadd.f32 %v604, %v615
        %v623 = vadd.f32 %v605, %v615
        %v624 = vadd.f32 %v606, %v615
        %v625 = vadd.f32 %v607, %v615
        %v626 = vadd.f32 %v608, %v615
        %v627 = vadd.f32 %v609, %v615
        %v628 = vadd.f32 %v610, %v615
        %v629 = vadd.f32 %v611, %v615
        %v630 = vadd.f32 %v612, %v615
        %v631 = vadd.f32 %v613, %v615
        %v632 = vmax.f32 %v616, 0.0
        %v633 = vmax.f32 %v617, 0.0
        %v634 = vmax.f32 %v618, 0.0
        %v635 = vmax.f32 %v619, 0.0
        %v636 = vmax.f32 %v620, 0.0
        %v637 = vmax.f32 %v621, 0.0
        %v638 = vmax.f32 %v622, 0.0
        %v639 = vmax.f32 %v623, 0.0
        %v640 = vmax.f32 %v624, 0.0
        %v641 = vmax.f32 %v625, 0.0
        %v642 = vmax.f32 %v626, 0.0
        %v643 = vmax.f32 %v627, 0.0
        %v644 = vmax.f32 %v628, 0.0
        %v645 = vmax.f32 %v629, 0.0
        %v646 = vmax.f32 %v630, 0.0
        %v647 = vmax.f32 %v631, 0.0
        %664 = vrot.lane.b32.xlu0 %v632, 127
        %v665 = vpop.permute.xlu0 %664
        %666 = vrot.lane.b32.xlu0 %v633, 127
        %v667 = vpop.permute.xlu0 %666
        %668 = vrot.lane.b32.xlu0 %v634, 127
        %v669 = vpop.permute.xlu0 %668
        %670 = vrot.lane.b32.xlu0 %v635, 127
        %v671 = vpop.permute.xlu0 %670
        %672 = vrot.lane.b32.xlu0 %v636, 127
        %v673 = vpop.permute.xlu0 %672
        %674 = vrot.lane.b32.xlu0 %v637, 127
        %v675 = vpop.permute.xlu0 %674
        %676 = vrot.lane.b32.xlu0 %v638, 127
        %v677 = vpop.permute.xlu0 %676
        %678 = vrot.lane.b32.xlu0 %v639, 127
        %v679 = vpop.permute.xlu0 %678
        %680 = vrot.lane.b32.xlu0 %v640, 127
        %v681 = vpop.permute.xlu0 %680
        %682 = vrot.lane.b32.xlu0 %v641, 127
        %v683 = vpop.permute.xlu0 %682
        %684 = vrot.lane.b32.xlu0 %v642, 127
        %v685 = vpop.permute.xlu0 %684
        %686 = vrot.lane.b32.xlu0 %v643, 127
        %v687 = vpop.permute.xlu0 %686
        %688 = vrot.lane.b32.xlu0 %v644, 127
        %v689 = vpop.permute.xlu0 %688
        %690 = vrot.lane.b32.xlu0 %v645, 127
        %v691 = vpop.permute.xlu0 %690
        %692 = vrot.lane.b32.xlu0 %v646, 127
        %v693 = vpop.permute.xlu0 %692
        %694 = vrot.lane.b32.xlu0 %v647, 127
        %v695 = vpop.permute.xlu0 %694
        %v712 = vmax.f32 %v632, %v665
        %v713 = vmax.f32 %v633, %v667
        %v714 = vmax.f32 %v634, %v669
        %v715 = vmax.f32 %v635, %v671
        %v716 = vmax.f32 %v636, %v673
        %v717 = vmax.f32 %v637, %v675
        %v718 = vmax.f32 %v638, %v677
        %v719 = vmax.f32 %v639, %v679
        %v720 = vmax.f32 %v640, %v681
        %v721 = vmax.f32 %v641, %v683
        %v722 = vmax.f32 %v642, %v685
        %v723 = vmax.f32 %v643, %v687
        %v724 = vmax.f32 %v644, %v689
        %v725 = vmax.f32 %v645, %v691
        %v726 = vmax.f32 %v646, %v693
        %v727 = vmax.f32 %v647, %v695
        %v728 = vlaneseq
        %v729 = vshrl.u32 %v728, 7
        %v730 = vadd.s32 %v729, 8
        %v731 = vadd.s32 %v729, 16
        %v732 = vadd.s32 %v729, 24
        %v733 = vadd.s32 %v729, 32
        %v734 = vadd.s32 %v729, 40
        %v735 = vadd.s32 %v729, 48
        %v736 = vadd.s32 %v729, 56
        %v737 = vlaneseq
        %v738 = vand.u32 %v737, 127
        %v739 = vmul.u32 %v738, 2
        %vm740 = vcmp.eq.s32.totalorder %v729, %v739
        %vm741 = vcmp.eq.s32.totalorder %v730, %v739
        %vm742 = vcmp.eq.s32.totalorder %v731, %v739
        %vm743 = vcmp.eq.s32.totalorder %v732, %v739
        %vm744 = vcmp.eq.s32.totalorder %v733, %v739
        %vm745 = vcmp.eq.s32.totalorder %v734, %v739
        %vm746 = vcmp.eq.s32.totalorder %v735, %v739
        %vm747 = vcmp.eq.s32.totalorder %v736, %v739
        %v748 = vsel %vm740, 1, 0
        %v749 = vsel %vm741, 1, 0
        %v750 = vsel %vm742, 1, 0
        %v751 = vsel %vm743, 1, 0
        %v752 = vsel %vm744, 1, 0
        %v753 = vsel %vm745, 1, 0
        %v754 = vsel %vm746, 1, 0
        %v755 = vsel %vm747, 1, 0
        %v756 = vcvt.s32.f32 %v748
        %v757 = vcvt.s32.f32 %v749
        %v758 = vcvt.s32.f32 %v750
        %v759 = vcvt.s32.f32 %v751
        %v760 = vcvt.s32.f32 %v752
        %v761 = vcvt.s32.f32 %v753
        %v762 = vcvt.s32.f32 %v754
        %v763 = vcvt.s32.f32 %v755
        %vm764 = vcmask 482304
        %v766 = vsel %vm764, %v712, 0
        %v769 = vsel %vm764, %v713, 0
        %v772 = vsel %vm764, %v714, 0
        %v775 = vsel %vm764, %v715, 0
        %v778 = vsel %vm764, %v716, 0
        %v781 = vsel %vm764, %v717, 0
        %v784 = vsel %vm764, %v718, 0
        %v787 = vsel %vm764, %v719, 0
        %v790 = vsel %vm764, %v720, 0
        %v793 = vsel %vm764, %v721, 0
        %v796 = vsel %vm764, %v722, 0
        %v799 = vsel %vm764, %v723, 0
        %v802 = vsel %vm764, %v724, 0
        %v805 = vsel %vm764, %v725, 0
        %v808 = vsel %vm764, %v726, 0
        %v811 = vsel %vm764, %v727, 0
        %vm813 = vcmask 1042432
        %v815 = vsel %vm813, %v763, 0
        %817 = vmatpush.msra.mxu0 0.0
        %818 = vmatpush.msra.mxu0 0.0
        %819 = vmatpush.msra.mxu0 0.0
        %820 = vmatpush.msra.mxu0 0.0
        %821 = vmatpush.msra.mxu0 0.0
        %822 = vmatpush.msra.mxu0 0.0
        %823 = vmatpush.msra.mxu0 0.0
        %824 = vmatpush.msra.mxu0 0.0
        %v825 = vand.u32 %v815, 4294901760
        %826 = vmatpush.msra.mxu0 %v825
        %v827 = vand.u32 %v762, 4294901760
        %828 = vmatpush.msra.mxu0 %v827
        %v829 = vand.u32 %v761, 4294901760
        %830 = vmatpush.msra.mxu0 %v829
        %v831 = vand.u32 %v760, 4294901760
        %832 = vmatpush.msra.mxu0 %v831
        %v833 = vand.u32 %v759, 4294901760
        %834 = vmatpush.msra.mxu0 %v833
        %v835 = vand.u32 %v758, 4294901760
        %836 = vmatpush.msra.mxu0 %v835
        %v837 = vand.u32 %v757, 4294901760
        %838 = vmatpush.msra.mxu0 %v837
        %v839 = vand.u32 %v756, 4294901760
        %840 = vmatpush.msra.mxu0 %v839
        %v841 = vand.u32 %v766, 4294901760
        %v842 = vsub.f32 %v766, %v841
        %v843 = vand.u32 %v842, 4294901760
        %v844 = vsub.f32 %v842, %v843
        %v845 = vand.u32 %v844, 4294901760
        %846 = vmatmul.f32.gmra.mxu0 %v845
        %v847 = vpop.f32.mrf.mxu0
        %v848 = vadd.f32 0.0, %v847
        %v849 = vand.u32 %v769, 4294901760
        %v850 = vsub.f32 %v769, %v849
        %v851 = vand.u32 %v850, 4294901760
        %v852 = vsub.f32 %v850, %v851
        %v853 = vand.u32 %v852, 4294901760
        %854 = vmatmul.f32.gmra.mxu0 %v853
        %v855 = vpop.f32.mrf.mxu0
        %v856 = vadd.f32 0.0, %v855
        %v857 = vand.u32 %v772, 4294901760
        %v858 = vsub.f32 %v772, %v857
        %v859 = vand.u32 %v858, 4294901760
        %v860 = vsub.f32 %v858, %v859
        %v861 = vand.u32 %v860, 4294901760
        %862 = vmatmul.f32.gmra.mxu0 %v861
        %v863 = vpop.f32.mrf.mxu0
        %v864 = vadd.f32 0.0, %v863
        %v865 = vand.u32 %v775, 4294901760
        %v866 = vsub.f32 %v775, %v865
        %v867 = vand.u32 %v866, 4294901760
        %v868 = vsub.f32 %v866, %v867
        %v869 = vand.u32 %v868, 4294901760
        %870 = vmatmul.f32.gmra.mxu0 %v869
        %v871 = vpop.f32.mrf.mxu0
        %v872 = vadd.f32 0.0, %v871
        %v873 = vand.u32 %v778, 4294901760
        %v874 = vsub.f32 %v778, %v873
        %v875 = vand.u32 %v874, 4294901760
        %v876 = vsub.f32 %v874, %v875
        %v877 = vand.u32 %v876, 4294901760
        %878 = vmatmul.f32.gmra.mxu0 %v877
        %v879 = vpop.f32.mrf.mxu0
        %v880 = vadd.f32 0.0, %v879
        %v881 = vand.u32 %v781, 4294901760
        %v882 = vsub.f32 %v781, %v881
        %v883 = vand.u32 %v882, 4294901760
        %v884 = vsub.f32 %v882, %v883
        %v885 = vand.u32 %v884, 4294901760
        %886 = vmatmul.f32.gmra.mxu0 %v885
        %v887 = vpop.f32.mrf.mxu0
        %v888 = vadd.f32 0.0, %v887
        %v889 = vand.u32 %v784, 4294901760
        %v890 = vsub.f32 %v784, %v889
        %v891 = vand.u32 %v890, 4294901760
        %v892 = vsub.f32 %v890, %v891
        %v893 = vand.u32 %v892, 4294901760
        %894 = vmatmul.f32.gmra.mxu0 %v893
        %v895 = vpop.f32.mrf.mxu0
        %v896 = vadd.f32 0.0, %v895
        %v897 = vand.u32 %v787, 4294901760
        %v898 = vsub.f32 %v787, %v897
        %v899 = vand.u32 %v898, 4294901760
        %v900 = vsub.f32 %v898, %v899
        %v901 = vand.u32 %v900, 4294901760
        %902 = vmatmul.f32.gmra.mxu0 %v901
        %v903 = vpop.f32.mrf.mxu0
        %v904 = vadd.f32 0.0, %v903
        %v905 = vand.u32 %v790, 4294901760
        %v906 = vsub.f32 %v790, %v905
        %v907 = vand.u32 %v906, 4294901760
        %v908 = vsub.f32 %v906, %v907
        %v909 = vand.u32 %v908, 4294901760
        %910 = vmatmul.f32.gmra.mxu0 %v909
        %v911 = vpop.f32.mrf.mxu0
        %v912 = vadd.f32 0.0, %v911
        %v913 = vand.u32 %v793, 4294901760
        %v914 = vsub.f32 %v793, %v913
        %v915 = vand.u32 %v914, 4294901760
        %v916 = vsub.f32 %v914, %v915
        %v917 = vand.u32 %v916, 4294901760
        %918 = vmatmul.f32.gmra.mxu0 %v917
        %v919 = vpop.f32.mrf.mxu0
        %v920 = vadd.f32 0.0, %v919
        %v921 = vand.u32 %v796, 4294901760
        %v922 = vsub.f32 %v796, %v921
        %v923 = vand.u32 %v922, 4294901760
        %v924 = vsub.f32 %v922, %v923
        %v925 = vand.u32 %v924, 4294901760
        %926 = vmatmul.f32.gmra.mxu0 %v925
        %v927 = vpop.f32.mrf.mxu0
        %v928 = vadd.f32 0.0, %v927
        %v929 = vand.u32 %v799, 4294901760
        %v930 = vsub.f32 %v799, %v929
        %v931 = vand.u32 %v930, 4294901760
        %v932 = vsub.f32 %v930, %v931
        %v933 = vand.u32 %v932, 4294901760
        %934 = vmatmul.f32.gmra.mxu0 %v933
        %v935 = vpop.f32.mrf.mxu0
        %v936 = vadd.f32 0.0, %v935
        %v937 = vand.u32 %v802, 4294901760
        %v938 = vsub.f32 %v802, %v937
        %v939 = vand.u32 %v938, 4294901760
        %v940 = vsub.f32 %v938, %v939
        %v941 = vand.u32 %v940, 4294901760
        %942 = vmatmul.f32.gmra.mxu0 %v941
        %v943 = vpop.f32.mrf.mxu0
        %v944 = vadd.f32 0.0, %v943
        %v945 = vand.u32 %v805, 4294901760
        %v946 = vsub.f32 %v805, %v945
        %v947 = vand.u32 %v946, 4294901760
        %v948 = vsub.f32 %v946, %v947
        %v949 = vand.u32 %v948, 4294901760
        %950 = vmatmul.f32.gmra.mxu0 %v949
        %v951 = vpop.f32.mrf.mxu0
        %v952 = vadd.f32 0.0, %v951
        %v953 = vand.u32 %v808, 4294901760
        %v954 = vsub.f32 %v808, %v953
        %v955 = vand.u32 %v954, 4294901760
        %v956 = vsub.f32 %v954, %v955
        %v957 = vand.u32 %v956, 4294901760
        %958 = vmatmul.f32.gmra.mxu0 %v957
        %v959 = vpop.f32.mrf.mxu0
        %v960 = vadd.f32 0.0, %v959
        %v961 = vand.u32 %v811, 4294901760
        %v962 = vsub.f32 %v811, %v961
        %v963 = vand.u32 %v962, 4294901760
        %v964 = vsub.f32 %v962, %v963
        %v965 = vand.u32 %v964, 4294901760
        %966 = vmatmul.f32.gmra.mxu0 %v965
        %v967 = vpop.f32.mrf.mxu0
        %v968 = vadd.f32 0.0, %v967
        %969 = vdwg.mxu0
        %970 = vmatpush.msra.mxu0 0.0
        %971 = vmatpush.msra.mxu0 0.0
        %972 = vmatpush.msra.mxu0 0.0
        %973 = vmatpush.msra.mxu0 0.0
        %974 = vmatpush.msra.mxu0 0.0
        %975 = vmatpush.msra.mxu0 0.0
        %976 = vmatpush.msra.mxu0 0.0
        %977 = vmatpush.msra.mxu0 0.0
        %v978 = vand.u32 %v815, 4294901760
        %v979 = vsub.f32 %v815, %v978
        %v980 = vand.u32 %v979, 4294901760
        %v981 = vsub.f32 %v979, %v980
        %v982 = vand.u32 %v981, 4294901760
        %983 = vmatpush.msra.mxu0 %v982
        %v984 = vand.u32 %v762, 4294901760
        %v985 = vsub.f32 %v762, %v984
        %v986 = vand.u32 %v985, 4294901760
        %v987 = vsub.f32 %v985, %v986
        %v988 = vand.u32 %v987, 4294901760
        %989 = vmatpush.msra.mxu0 %v988
        %v990 = vand.u32 %v761, 4294901760
        %v991 = vsub.f32 %v761, %v990
        %v992 = vand.u32 %v991, 4294901760
        %v993 = vsub.f32 %v991, %v992
        %v994 = vand.u32 %v993, 4294901760
        %995 = vmatpush.msra.mxu0 %v994
        %v996 = vand.u32 %v760, 4294901760
        %v997 = vsub.f32 %v760, %v996
        %v998 = vand.u32 %v997, 4294901760
        %v999 = vsub.f32 %v997, %v998
        %v1000 = vand.u32 %v999, 4294901760
        %1001 = vmatpush.msra.mxu0 %v1000
        %v1002 = vand.u32 %v759, 4294901760
        %v1003 = vsub.f32 %v759, %v1002
        %v1004 = vand.u32 %v1003, 4294901760
        %v1005 = vsub.f32 %v1003, %v1004
        %v1006 = vand.u32 %v1005, 4294901760
        %1007 = vmatpush.msra.mxu0 %v1006
        %v1008 = vand.u32 %v758, 4294901760
        %v1009 = vsub.f32 %v758, %v1008
        %v1010 = vand.u32 %v1009, 4294901760
        %v1011 = vsub.f32 %v1009, %v1010
        %v1012 = vand.u32 %v1011, 4294901760
        %1013 = vmatpush.msra.mxu0 %v1012
        %v1014 = vand.u32 %v757, 4294901760
        %v1015 = vsub.f32 %v757, %v1014
        %v1016 = vand.u32 %v1015, 4294901760
        %v1017 = vsub.f32 %v1015, %v1016
        %v1018 = vand.u32 %v1017, 4294901760
        %1019 = vmatpush.msra.mxu0 %v1018
        %v1020 = vand.u32 %v756, 4294901760
        %v1021 = vsub.f32 %v756, %v1020
        %v1022 = vand.u32 %v1021, 4294901760
        %v1023 = vsub.f32 %v1021, %v1022
        %v1024 = vand.u32 %v1023, 4294901760
        %1025 = vmatpush.msra.mxu0 %v1024
        %v1026 = vand.u32 %v766, 4294901760
        %1027 = vmatmul.f32.gmra.mxu0 %v1026
        %v1028 = vpop.f32.mrf.mxu0
        %v1029 = vadd.f32 %v848, %v1028
        %v1030 = vand.u32 %v769, 4294901760
        %1031 = vmatmul.f32.gmra.mxu0 %v1030
        %v1032 = vpop.f32.mrf.mxu0
        %v1033 = vadd.f32 %v856, %v1032
        %v1034 = vand.u32 %v772, 4294901760
        %1035 = vmatmul.f32.gmra.mxu0 %v1034
        %v1036 = vpop.f32.mrf.mxu0
        %v1037 = vadd.f32 %v864, %v1036
        %v1038 = vand.u32 %v775, 4294901760
        %1039 = vmatmul.f32.gmra.mxu0 %v1038
        %v1040 = vpop.f32.mrf.mxu0
        %v1041 = vadd.f32 %v872, %v1040
        %v1042 = vand.u32 %v778, 4294901760
        %1043 = vmatmul.f32.gmra.mxu0 %v1042
        %v1044 = vpop.f32.mrf.mxu0
        %v1045 = vadd.f32 %v880, %v1044
        %v1046 = vand.u32 %v781, 4294901760
        %1047 = vmatmul.f32.gmra.mxu0 %v1046
        %v1048 = vpop.f32.mrf.mxu0
        %v1049 = vadd.f32 %v888, %v1048
        %v1050 = vand.u32 %v784, 4294901760
        %1051 = vmatmul.f32.gmra.mxu0 %v1050
        %v1052 = vpop.f32.mrf.mxu0
        %v1053 = vadd.f32 %v896, %v1052
        %v1054 = vand.u32 %v787, 4294901760
        %1055 = vmatmul.f32.gmra.mxu0 %v1054
        %v1056 = vpop.f32.mrf.mxu0
        %v1057 = vadd.f32 %v904, %v1056
        %v1058 = vand.u32 %v790, 4294901760
        %1059 = vmatmul.f32.gmra.mxu0 %v1058
        %v1060 = vpop.f32.mrf.mxu0
        %v1061 = vadd.f32 %v912, %v1060
        %v1062 = vand.u32 %v793, 4294901760
        %1063 = vmatmul.f32.gmra.mxu0 %v1062
        %v1064 = vpop.f32.mrf.mxu0
        %v1065 = vadd.f32 %v920, %v1064
        %v1066 = vand.u32 %v796, 4294901760
        %1067 = vmatmul.f32.gmra.mxu0 %v1066
        %v1068 = vpop.f32.mrf.mxu0
        %v1069 = vadd.f32 %v928, %v1068
        %v1070 = vand.u32 %v799, 4294901760
        %1071 = vmatmul.f32.gmra.mxu0 %v1070
        %v1072 = vpop.f32.mrf.mxu0
        %v1073 = vadd.f32 %v936, %v1072
        %v1074 = vand.u32 %v802, 4294901760
        %1075 = vmatmul.f32.gmra.mxu0 %v1074
        %v1076 = vpop.f32.mrf.mxu0
        %v1077 = vadd.f32 %v944, %v1076
        %v1078 = vand.u32 %v805, 4294901760
        %1079 = vmatmul.f32.gmra.mxu0 %v1078
        %v1080 = vpop.f32.mrf.mxu0
        %v1081 = vadd.f32 %v952, %v1080
        %v1082 = vand.u32 %v808, 4294901760
        %1083 = vmatmul.f32.gmra.mxu0 %v1082
        %v1084 = vpop.f32.mrf.mxu0
        %v1085 = vadd.f32 %v960, %v1084
        %v1086 = vand.u32 %v811, 4294901760
        %1087 = vmatmul.f32.gmra.mxu0 %v1086
        %v1088 = vpop.f32.mrf.mxu0
        %v1089 = vadd.f32 %v968, %v1088
        %1090 = vdwg.mxu0
        %1091 = vmatpush.msra.mxu0 0.0
        %1092 = vmatpush.msra.mxu0 0.0
        %1093 = vmatpush.msra.mxu0 0.0
        %1094 = vmatpush.msra.mxu0 0.0
        %1095 = vmatpush.msra.mxu0 0.0
        %1096 = vmatpush.msra.mxu0 0.0
        %1097 = vmatpush.msra.mxu0 0.0
        %1098 = vmatpush.msra.mxu0 0.0
        %v1099 = vand.u32 %v815, 4294901760
        %v1100 = vsub.f32 %v815, %v1099
        %1101 = vmatpush.msra.mxu0 %v1100
        %v1102 = vand.u32 %v762, 4294901760
        %v1103 = vsub.f32 %v762, %v1102
        %1104 = vmatpush.msra.mxu0 %v1103
        %v1105 = vand.u32 %v761, 4294901760
        %v1106 = vsub.f32 %v761, %v1105
        %1107 = vmatpush.msra.mxu0 %v1106
        %v1108 = vand.u32 %v760, 4294901760
        %v1109 = vsub.f32 %v760, %v1108
        %1110 = vmatpush.msra.mxu0 %v1109
        %v1111 = vand.u32 %v759, 4294901760
        %v1112 = vsub.f32 %v759, %v1111
        %1113 = vmatpush.msra.mxu0 %v1112
        %v1114 = vand.u32 %v758, 4294901760
        %v1115 = vsub.f32 %v758, %v1114
        %1116 = vmatpush.msra.mxu0 %v1115
        %v1117 = vand.u32 %v757, 4294901760
        %v1118 = vsub.f32 %v757, %v1117
        %1119 = vmatpush.msra.mxu0 %v1118
        %v1120 = vand.u32 %v756, 4294901760
        %v1121 = vsub.f32 %v756, %v1120
        %1122 = vmatpush.msra.mxu0 %v1121
        %v1123 = vand.u32 %v766, 4294901760
        %v1124 = vsub.f32 %v766, %v1123
        %1125 = vmatmul.f32.gmra.mxu0 %v1124
        %v1126 = vpop.f32.mrf.mxu0
        %v1127 = vadd.f32 %v1029, %v1126
        %v1128 = vand.u32 %v769, 4294901760
        %v1129 = vsub.f32 %v769, %v1128
        %1130 = vmatmul.f32.gmra.mxu0 %v1129
        %v1131 = vpop.f32.mrf.mxu0
        %v1132 = vadd.f32 %v1033, %v1131
        %v1133 = vand.u32 %v772, 4294901760
        %v1134 = vsub.f32 %v772, %v1133
        %1135 = vmatmul.f32.gmra.mxu0 %v1134
        %v1136 = vpop.f32.mrf.mxu0
        %v1137 = vadd.f32 %v1037, %v1136
        %v1138 = vand.u32 %v775, 4294901760
        %v1139 = vsub.f32 %v775, %v1138
        %1140 = vmatmul.f32.gmra.mxu0 %v1139
        %v1141 = vpop.f32.mrf.mxu0
        %v1142 = vadd.f32 %v1041, %v1141
        %v1143 = vand.u32 %v778, 4294901760
        %v1144 = vsub.f32 %v778, %v1143
        %1145 = vmatmul.f32.gmra.mxu0 %v1144
        %v1146 = vpop.f32.mrf.mxu0
        %v1147 = vadd.f32 %v1045, %v1146
        %v1148 = vand.u32 %v781, 4294901760
        %v1149 = vsub.f32 %v781, %v1148
        %1150 = vmatmul.f32.gmra.mxu0 %v1149
        %v1151 = vpop.f32.mrf.mxu0
        %v1152 = vadd.f32 %v1049, %v1151
        %v1153 = vand.u32 %v784, 4294901760
        %v1154 = vsub.f32 %v784, %v1153
        %1155 = vmatmul.f32.gmra.mxu0 %v1154
        %v1156 = vpop.f32.mrf.mxu0
        %v1157 = vadd.f32 %v1053, %v1156
        %v1158 = vand.u32 %v787, 4294901760
        %v1159 = vsub.f32 %v787, %v1158
        %1160 = vmatmul.f32.gmra.mxu0 %v1159
        %v1161 = vpop.f32.mrf.mxu0
        %v1162 = vadd.f32 %v1057, %v1161
        %v1163 = vand.u32 %v790, 4294901760
        %v1164 = vsub.f32 %v790, %v1163
        %1165 = vmatmul.f32.gmra.mxu0 %v1164
        %v1166 = vpop.f32.mrf.mxu0
        %v1167 = vadd.f32 %v1061, %v1166
        %v1168 = vand.u32 %v793, 4294901760
        %v1169 = vsub.f32 %v793, %v1168
        %1170 = vmatmul.f32.gmra.mxu0 %v1169
        %v1171 = vpop.f32.mrf.mxu0
        %v1172 = vadd.f32 %v1065, %v1171
        %v1173 = vand.u32 %v796, 4294901760
        %v1174 = vsub.f32 %v796, %v1173
        %1175 = vmatmul.f32.gmra.mxu0 %v1174
        %v1176 = vpop.f32.mrf.mxu0
        %v1177 = vadd.f32 %v1069, %v1176
        %v1178 = vand.u32 %v799, 4294901760
        %v1179 = vsub.f32 %v799, %v1178
        %1180 = vmatmul.f32.gmra.mxu0 %v1179
        %v1181 = vpop.f32.mrf.mxu0
        %v1182 = vadd.f32 %v1073, %v1181
        %v1183 = vand.u32 %v802, 4294901760
        %v1184 = vsub.f32 %v802, %v1183
        %1185 = vmatmul.f32.gmra.mxu0 %v1184
        %v1186 = vpop.f32.mrf.mxu0
        %v1187 = vadd.f32 %v1077, %v1186
        %v1188 = vand.u32 %v805, 4294901760
        %v1189 = vsub.f32 %v805, %v1188
        %1190 = vmatmul.f32.gmra.mxu0 %v1189
        %v1191 = vpop.f32.mrf.mxu0
        %v1192 = vadd.f32 %v1081, %v1191
        %v1193 = vand.u32 %v808, 4294901760
        %v1194 = vsub.f32 %v808, %v1193
        %1195 = vmatmul.f32.gmra.mxu0 %v1194
        %v1196 = vpop.f32.mrf.mxu0
        %v1197 = vadd.f32 %v1085, %v1196
        %v1198 = vand.u32 %v811, 4294901760
        %v1199 = vsub.f32 %v811, %v1198
        %1200 = vmatmul.f32.gmra.mxu0 %v1199
        %v1201 = vpop.f32.mrf.mxu0
        %v1202 = vadd.f32 %v1089, %v1201
        %1203 = vdwg.mxu0
        %1204 = vmatpush.msra.mxu0 0.0
        %1205 = vmatpush.msra.mxu0 0.0
        %1206 = vmatpush.msra.mxu0 0.0
        %1207 = vmatpush.msra.mxu0 0.0
        %1208 = vmatpush.msra.mxu0 0.0
        %1209 = vmatpush.msra.mxu0 0.0
        %1210 = vmatpush.msra.mxu0 0.0
        %1211 = vmatpush.msra.mxu0 0.0
        %v1212 = vand.u32 %v815, 4294901760
        %1213 = vmatpush.msra.mxu0 %v1212
        %v1214 = vand.u32 %v762, 4294901760
        %1215 = vmatpush.msra.mxu0 %v1214
        %v1216 = vand.u32 %v761, 4294901760
        %1217 = vmatpush.msra.mxu0 %v1216
        %v1218 = vand.u32 %v760, 4294901760
        %1219 = vmatpush.msra.mxu0 %v1218
        %v1220 = vand.u32 %v759, 4294901760
        %1221 = vmatpush.msra.mxu0 %v1220
        %v1222 = vand.u32 %v758, 4294901760
        %1223 = vmatpush.msra.mxu0 %v1222
        %v1224 = vand.u32 %v757, 4294901760
        %1225 = vmatpush.msra.mxu0 %v1224
        %v1226 = vand.u32 %v756, 4294901760
        %1227 = vmatpush.msra.mxu0 %v1226
        %v1228 = vand.u32 %v766, 4294901760
        %v1229 = vsub.f32 %v766, %v1228
        %v1230 = vand.u32 %v1229, 4294901760
        %1231 = vmatmul.f32.gmra.mxu0 %v1230
        %v1232 = vpop.f32.mrf.mxu0
        %v1233 = vadd.f32 %v1127, %v1232
        %v1234 = vand.u32 %v769, 4294901760
        %v1235 = vsub.f32 %v769, %v1234
        %v1236 = vand.u32 %v1235, 4294901760
        %1237 = vmatmul.f32.gmra.mxu0 %v1236
        %v1238 = vpop.f32.mrf.mxu0
        %v1239 = vadd.f32 %v1132, %v1238
        %v1240 = vand.u32 %v772, 4294901760
        %v1241 = vsub.f32 %v772, %v1240
        %v1242 = vand.u32 %v1241, 4294901760
        %1243 = vmatmul.f32.gmra.mxu0 %v1242
        %v1244 = vpop.f32.mrf.mxu0
        %v1245 = vadd.f32 %v1137, %v1244
        %v1246 = vand.u32 %v775, 4294901760
        %v1247 = vsub.f32 %v775, %v1246
        %v1248 = vand.u32 %v1247, 4294901760
        %1249 = vmatmul.f32.gmra.mxu0 %v1248
        %v1250 = vpop.f32.mrf.mxu0
        %v1251 = vadd.f32 %v1142, %v1250
        %v1252 = vand.u32 %v778, 4294901760
        %v1253 = vsub.f32 %v778, %v1252
        %v1254 = vand.u32 %v1253, 4294901760
        %1255 = vmatmul.f32.gmra.mxu0 %v1254
        %v1256 = vpop.f32.mrf.mxu0
        %v1257 = vadd.f32 %v1147, %v1256
        %v1258 = vand.u32 %v781, 4294901760
        %v1259 = vsub.f32 %v781, %v1258
        %v1260 = vand.u32 %v1259, 4294901760
        %1261 = vmatmul.f32.gmra.mxu0 %v1260
        %v1262 = vpop.f32.mrf.mxu0
        %v1263 = vadd.f32 %v1152, %v1262
        %v1264 = vand.u32 %v784, 4294901760
        %v1265 = vsub.f32 %v784, %v1264
        %v1266 = vand.u32 %v1265, 4294901760
        %1267 = vmatmul.f32.gmra.mxu0 %v1266
        %v1268 = vpop.f32.mrf.mxu0
        %v1269 = vadd.f32 %v1157, %v1268
        %v1270 = vand.u32 %v787, 4294901760
        %v1271 = vsub.f32 %v787, %v1270
        %v1272 = vand.u32 %v1271, 4294901760
        %1273 = vmatmul.f32.gmra.mxu0 %v1272
        %v1274 = vpop.f32.mrf.mxu0
        %v1275 = vadd.f32 %v1162, %v1274
        %v1276 = vand.u32 %v790, 4294901760
        %v1277 = vsub.f32 %v790, %v1276
        %v1278 = vand.u32 %v1277, 4294901760
        %1279 = vmatmul.f32.gmra.mxu0 %v1278
        %v1280 = vpop.f32.mrf.mxu0
        %v1281 = vadd.f32 %v1167, %v1280
        %v1282 = vand.u32 %v793, 4294901760
        %v1283 = vsub.f32 %v793, %v1282
        %v1284 = vand.u32 %v1283, 4294901760
        %1285 = vmatmul.f32.gmra.mxu0 %v1284
        %v1286 = vpop.f32.mrf.mxu0
        %v1287 = vadd.f32 %v1172, %v1286
        %v1288 = vand.u32 %v796, 4294901760
        %v1289 = vsub.f32 %v796, %v1288
        %v1290 = vand.u32 %v1289, 4294901760
        %1291 = vmatmul.f32.gmra.mxu0 %v1290
        %v1292 = vpop.f32.mrf.mxu0
        %v1293 = vadd.f32 %v1177, %v1292
        %v1294 = vand.u32 %v799, 4294901760
        %v1295 = vsub.f32 %v799, %v1294
        %v1296 = vand.u32 %v1295, 4294901760
        %1297 = vmatmul.f32.gmra.mxu0 %v1296
        %v1298 = vpop.f32.mrf.mxu0
        %v1299 = vadd.f32 %v1182, %v1298
        %v1300 = vand.u32 %v802, 4294901760
        %v1301 = vsub.f32 %v802, %v1300
        %v1302 = vand.u32 %v1301, 4294901760
        %1303 = vmatmul.f32.gmra.mxu0 %v1302
        %v1304 = vpop.f32.mrf.mxu0
        %v1305 = vadd.f32 %v1187, %v1304
        %v1306 = vand.u32 %v805, 4294901760
        %v1307 = vsub.f32 %v805, %v1306
        %v1308 = vand.u32 %v1307, 4294901760
        %1309 = vmatmul.f32.gmra.mxu0 %v1308
        %v1310 = vpop.f32.mrf.mxu0
        %v1311 = vadd.f32 %v1192, %v1310
        %v1312 = vand.u32 %v808, 4294901760
        %v1313 = vsub.f32 %v808, %v1312
        %v1314 = vand.u32 %v1313, 4294901760
        %1315 = vmatmul.f32.gmra.mxu0 %v1314
        %v1316 = vpop.f32.mrf.mxu0
        %v1317 = vadd.f32 %v1197, %v1316
        %v1318 = vand.u32 %v811, 4294901760
        %v1319 = vsub.f32 %v811, %v1318
        %v1320 = vand.u32 %v1319, 4294901760
        %1321 = vmatmul.f32.gmra.mxu0 %v1320
        %v1322 = vpop.f32.mrf.mxu0
        %v1323 = vadd.f32 %v1202, %v1322
        %1324 = vdwg.mxu0
        %1325 = vmatpush.msra.mxu0 0.0
        %1326 = vmatpush.msra.mxu0 0.0
        %1327 = vmatpush.msra.mxu0 0.0
        %1328 = vmatpush.msra.mxu0 0.0
        %1329 = vmatpush.msra.mxu0 0.0
        %1330 = vmatpush.msra.mxu0 0.0
        %1331 = vmatpush.msra.mxu0 0.0
        %1332 = vmatpush.msra.mxu0 0.0
        %v1333 = vand.u32 %v815, 4294901760
        %v1334 = vsub.f32 %v815, %v1333
        %v1335 = vand.u32 %v1334, 4294901760
        %1336 = vmatpush.msra.mxu0 %v1335
        %v1337 = vand.u32 %v762, 4294901760
        %v1338 = vsub.f32 %v762, %v1337
        %v1339 = vand.u32 %v1338, 4294901760
        %1340 = vmatpush.msra.mxu0 %v1339
        %v1341 = vand.u32 %v761, 4294901760
        %v1342 = vsub.f32 %v761, %v1341
        %v1343 = vand.u32 %v1342, 4294901760
        %1344 = vmatpush.msra.mxu0 %v1343
        %v1345 = vand.u32 %v760, 4294901760
        %v1346 = vsub.f32 %v760, %v1345
        %v1347 = vand.u32 %v1346, 4294901760
        %1348 = vmatpush.msra.mxu0 %v1347
        %v1349 = vand.u32 %v759, 4294901760
        %v1350 = vsub.f32 %v759, %v1349
        %v1351 = vand.u32 %v1350, 4294901760
        %1352 = vmatpush.msra.mxu0 %v1351
        %v1353 = vand.u32 %v758, 4294901760
        %v1354 = vsub.f32 %v758, %v1353
        %v1355 = vand.u32 %v1354, 4294901760
        %1356 = vmatpush.msra.mxu0 %v1355
        %v1357 = vand.u32 %v757, 4294901760
        %v1358 = vsub.f32 %v757, %v1357
        %v1359 = vand.u32 %v1358, 4294901760
        %1360 = vmatpush.msra.mxu0 %v1359
        %v1361 = vand.u32 %v756, 4294901760
        %v1362 = vsub.f32 %v756, %v1361
        %v1363 = vand.u32 %v1362, 4294901760
        %1364 = vmatpush.msra.mxu0 %v1363
        %v1365 = vand.u32 %v766, 4294901760
        %1366 = vmatmul.f32.gmra.mxu0 %v1365
        %v1367 = vpop.f32.mrf.mxu0
        %v1368 = vadd.f32 %v1233, %v1367
        %v1369 = vand.u32 %v769, 4294901760
        %1370 = vmatmul.f32.gmra.mxu0 %v1369
        %v1371 = vpop.f32.mrf.mxu0
        %v1372 = vadd.f32 %v1239, %v1371
        %v1373 = vand.u32 %v772, 4294901760
        %1374 = vmatmul.f32.gmra.mxu0 %v1373
        %v1375 = vpop.f32.mrf.mxu0
        %v1376 = vadd.f32 %v1245, %v1375
        %v1377 = vand.u32 %v775, 4294901760
        %1378 = vmatmul.f32.gmra.mxu0 %v1377
        %v1379 = vpop.f32.mrf.mxu0
        %v1380 = vadd.f32 %v1251, %v1379
        %v1381 = vand.u32 %v778, 4294901760
        %1382 = vmatmul.f32.gmra.mxu0 %v1381
        %v1383 = vpop.f32.mrf.mxu0
        %v1384 = vadd.f32 %v1257, %v1383
        %v1385 = vand.u32 %v781, 4294901760
        %1386 = vmatmul.f32.gmra.mxu0 %v1385
        %v1387 = vpop.f32.mrf.mxu0
        %v1388 = vadd.f32 %v1263, %v1387
        %v1389 = vand.u32 %v784, 4294901760
        %1390 = vmatmul.f32.gmra.mxu0 %v1389
        %v1391 = vpop.f32.mrf.mxu0
        %v1392 = vadd.f32 %v1269, %v1391
        %v1393 = vand.u32 %v787, 4294901760
        %1394 = vmatmul.f32.gmra.mxu0 %v1393
        %v1395 = vpop.f32.mrf.mxu0
        %v1396 = vadd.f32 %v1275, %v1395
        %v1397 = vand.u32 %v790, 4294901760
        %1398 = vmatmul.f32.gmra.mxu0 %v1397
        %v1399 = vpop.f32.mrf.mxu0
        %v1400 = vadd.f32 %v1281, %v1399
        %v1401 = vand.u32 %v793, 4294901760
        %1402 = vmatmul.f32.gmra.mxu0 %v1401
        %v1403 = vpop.f32.mrf.mxu0
        %v1404 = vadd.f32 %v1287, %v1403
        %v1405 = vand.u32 %v796, 4294901760
        %1406 = vmatmul.f32.gmra.mxu0 %v1405
        %v1407 = vpop.f32.mrf.mxu0
        %v1408 = vadd.f32 %v1293, %v1407
        %v1409 = vand.u32 %v799, 4294901760
        %1410 = vmatmul.f32.gmra.mxu0 %v1409
        %v1411 = vpop.f32.mrf.mxu0
        %v1412 = vadd.f32 %v1299, %v1411
        %v1413 = vand.u32 %v802, 4294901760
        %1414 = vmatmul.f32.gmra.mxu0 %v1413
        %v1415 = vpop.f32.mrf.mxu0
        %v1416 = vadd.f32 %v1305, %v1415
        %v1417 = vand.u32 %v805, 4294901760
        %1418 = vmatmul.f32.gmra.mxu0 %v1417
        %v1419 = vpop.f32.mrf.mxu0
        %v1420 = vadd.f32 %v1311, %v1419
        %v1421 = vand.u32 %v808, 4294901760
        %1422 = vmatmul.f32.gmra.mxu0 %v1421
        %v1423 = vpop.f32.mrf.mxu0
        %v1424 = vadd.f32 %v1317, %v1423
        %v1425 = vand.u32 %v811, 4294901760
        %1426 = vmatmul.f32.gmra.mxu0 %v1425
        %v1427 = vpop.f32.mrf.mxu0
        %v1428 = vadd.f32 %v1323, %v1427
        %1429 = vdwg.mxu0
        %1430 = vmatpush.msra.mxu0 0.0
        %1431 = vmatpush.msra.mxu0 0.0
        %1432 = vmatpush.msra.mxu0 0.0
        %1433 = vmatpush.msra.mxu0 0.0
        %1434 = vmatpush.msra.mxu0 0.0
        %1435 = vmatpush.msra.mxu0 0.0
        %1436 = vmatpush.msra.mxu0 0.0
        %1437 = vmatpush.msra.mxu0 0.0
        %v1438 = vand.u32 %v815, 4294901760
        %1439 = vmatpush.msra.mxu0 %v1438
        %v1440 = vand.u32 %v762, 4294901760
        %1441 = vmatpush.msra.mxu0 %v1440
        %v1442 = vand.u32 %v761, 4294901760
        %1443 = vmatpush.msra.mxu0 %v1442
        %v1444 = vand.u32 %v760, 4294901760
        %1445 = vmatpush.msra.mxu0 %v1444
        %v1446 = vand.u32 %v759, 4294901760
        %1447 = vmatpush.msra.mxu0 %v1446
        %v1448 = vand.u32 %v758, 4294901760
        %1449 = vmatpush.msra.mxu0 %v1448
        %v1450 = vand.u32 %v757, 4294901760
        %1451 = vmatpush.msra.mxu0 %v1450
        %v1452 = vand.u32 %v756, 4294901760
        %1453 = vmatpush.msra.mxu0 %v1452
        %v1454 = vand.u32 %v766, 4294901760
        %1455 = vmatmul.f32.gmra.mxu0 %v1454
        %v1456 = vpop.f32.mrf.mxu0
        %v1457 = vadd.f32 %v1368, %v1456
        %v1458 = vand.u32 %v769, 4294901760
        %1459 = vmatmul.f32.gmra.mxu0 %v1458
        %v1460 = vpop.f32.mrf.mxu0
        %v1461 = vadd.f32 %v1372, %v1460
        %v1462 = vand.u32 %v772, 4294901760
        %1463 = vmatmul.f32.gmra.mxu0 %v1462
        %v1464 = vpop.f32.mrf.mxu0
        %v1465 = vadd.f32 %v1376, %v1464
        %v1466 = vand.u32 %v775, 4294901760
        %1467 = vmatmul.f32.gmra.mxu0 %v1466
        %v1468 = vpop.f32.mrf.mxu0
        %v1469 = vadd.f32 %v1380, %v1468
        %v1470 = vand.u32 %v778, 4294901760
        %1471 = vmatmul.f32.gmra.mxu0 %v1470
        %v1472 = vpop.f32.mrf.mxu0
        %v1473 = vadd.f32 %v1384, %v1472
        %v1474 = vand.u32 %v781, 4294901760
        %1475 = vmatmul.f32.gmra.mxu0 %v1474
        %v1476 = vpop.f32.mrf.mxu0
        %v1477 = vadd.f32 %v1388, %v1476
        %v1478 = vand.u32 %v784, 4294901760
        %1479 = vmatmul.f32.gmra.mxu0 %v1478
        %v1480 = vpop.f32.mrf.mxu0
        %v1481 = vadd.f32 %v1392, %v1480
        %v1482 = vand.u32 %v787, 4294901760
        %1483 = vmatmul.f32.gmra.mxu0 %v1482
        %v1484 = vpop.f32.mrf.mxu0
        %v1485 = vadd.f32 %v1396, %v1484
        %v1486 = vand.u32 %v790, 4294901760
        %1487 = vmatmul.f32.gmra.mxu0 %v1486
        %v1488 = vpop.f32.mrf.mxu0
        %v1489 = vadd.f32 %v1400, %v1488
        %v1490 = vand.u32 %v793, 4294901760
        %1491 = vmatmul.f32.gmra.mxu0 %v1490
        %v1492 = vpop.f32.mrf.mxu0
        %v1493 = vadd.f32 %v1404, %v1492
        %v1494 = vand.u32 %v796, 4294901760
        %1495 = vmatmul.f32.gmra.mxu0 %v1494
        %v1496 = vpop.f32.mrf.mxu0
        %v1497 = vadd.f32 %v1408, %v1496
        %v1498 = vand.u32 %v799, 4294901760
        %1499 = vmatmul.f32.gmra.mxu0 %v1498
        %v1500 = vpop.f32.mrf.mxu0
        %v1501 = vadd.f32 %v1412, %v1500
        %v1502 = vand.u32 %v802, 4294901760
        %1503 = vmatmul.f32.gmra.mxu0 %v1502
        %v1504 = vpop.f32.mrf.mxu0
        %v1505 = vadd.f32 %v1416, %v1504
        %v1506 = vand.u32 %v805, 4294901760
        %1507 = vmatmul.f32.gmra.mxu0 %v1506
        %v1508 = vpop.f32.mrf.mxu0
        %v1509 = vadd.f32 %v1420, %v1508
        %v1510 = vand.u32 %v808, 4294901760
        %1511 = vmatmul.f32.gmra.mxu0 %v1510
        %v1512 = vpop.f32.mrf.mxu0
        %v1513 = vadd.f32 %v1424, %v1512
        %v1514 = vand.u32 %v811, 4294901760
        %1515 = vmatmul.f32.gmra.mxu0 %v1514
        %v1516 = vpop.f32.mrf.mxu0
        %v1517 = vadd.f32 %v1428, %v1516
        %1518 = vdwg.mxu0
        %s1519 = sld [smem:[#allocation2 + $0x6]]
        %v1520 = vstv %s1519
        %v1521 = vmul.f32 %v1520, %v1457
        %v1522 = vmul.f32 %v1520, %v1461
        %v1523 = vmul.f32 %v1520, %v1465
        %v1524 = vmul.f32 %v1520, %v1469
        %v1525 = vmul.f32 %v1520, %v1473
        %v1526 = vmul.f32 %v1520, %v1477
        %v1527 = vmul.f32 %v1520, %v1481
        %v1528 = vmul.f32 %v1520, %v1485
        %v1529 = vmul.f32 %v1520, %v1489
        %v1530 = vmul.f32 %v1520, %v1493
        %v1531 = vmul.f32 %v1520, %v1497
        %v1532 = vmul.f32 %v1520, %v1501
        %v1533 = vmul.f32 %v1520, %v1505
        %v1534 = vmul.f32 %v1520, %v1509
        %v1535 = vmul.f32 %v1520, %v1513
        %v1536 = vmul.f32 %v1520, %v1517
        %s1537 = sld [smem:[#allocation2 + $0x7]]
        %v1538 = vstv %s1537
        %v1539 = vmul.f32 %v1538, %v1457
        %v1540 = vmul.f32 %v1538, %v1461
        %v1541 = vmul.f32 %v1538, %v1465
        %v1542 = vmul.f32 %v1538, %v1469
        %v1543 = vmul.f32 %v1538, %v1473
        %v1544 = vmul.f32 %v1538, %v1477
        %v1545 = vmul.f32 %v1538, %v1481
        %v1546 = vmul.f32 %v1538, %v1485
        %v1547 = vmul.f32 %v1538, %v1489
        %v1548 = vmul.f32 %v1538, %v1493
        %v1549 = vmul.f32 %v1538, %v1497
        %v1550 = vmul.f32 %v1538, %v1501
        %v1551 = vmul.f32 %v1538, %v1505
        %v1552 = vmul.f32 %v1538, %v1509
        %v1553 = vmul.f32 %v1538, %v1513
        %v1554 = vmul.f32 %v1538, %v1517
        %1571 = vrot.lane.b32.xlu0 %v1539, 127
        %v1572 = vpop.permute.xlu0 %1571
        %1573 = vrot.lane.b32.xlu0 %v1540, 127
        %v1574 = vpop.permute.xlu0 %1573
        %1575 = vrot.lane.b32.xlu0 %v1541, 127
        %v1576 = vpop.permute.xlu0 %1575
        %1577 = vrot.lane.b32.xlu0 %v1542, 127
        %v1578 = vpop.permute.xlu0 %1577
        %1579 = vrot.lane.b32.xlu0 %v1543, 127
        %v1580 = vpop.permute.xlu0 %1579
        %1581 = vrot.lane.b32.xlu0 %v1544, 127
        %v1582 = vpop.permute.xlu0 %1581
        %1583 = vrot.lane.b32.xlu0 %v1545, 127
        %v1584 = vpop.permute.xlu0 %1583
        %1585 = vrot.lane.b32.xlu0 %v1546, 127
        %v1586 = vpop.permute.xlu0 %1585
        %1587 = vrot.lane.b32.xlu0 %v1547, 127
        %v1588 = vpop.permute.xlu0 %1587
        %1589 = vrot.lane.b32.xlu0 %v1548, 127
        %v1590 = vpop.permute.xlu0 %1589
        %1591 = vrot.lane.b32.xlu0 %v1549, 127
        %v1592 = vpop.permute.xlu0 %1591
        %1593 = vrot.lane.b32.xlu0 %v1550, 127
        %v1594 = vpop.permute.xlu0 %1593
        %1595 = vrot.lane.b32.xlu0 %v1551, 127
        %v1596 = vpop.permute.xlu0 %1595
        %1597 = vrot.lane.b32.xlu0 %v1552, 127
        %v1598 = vpop.permute.xlu0 %1597
        %1599 = vrot.lane.b32.xlu0 %v1553, 127
        %v1600 = vpop.permute.xlu0 %1599
        %1601 = vrot.lane.b32.xlu0 %v1554, 127
        %v1602 = vpop.permute.xlu0 %1601
        %v1619 = vadd.f32 %v1521, %v1572
        %v1620 = vadd.f32 %v1522, %v1574
        %v1621 = vadd.f32 %v1523, %v1576
        %v1622 = vadd.f32 %v1524, %v1578
        %v1623 = vadd.f32 %v1525, %v1580
        %v1624 = vadd.f32 %v1526, %v1582
        %v1625 = vadd.f32 %v1527, %v1584
        %v1626 = vadd.f32 %v1528, %v1586
        %v1627 = vadd.f32 %v1529, %v1588
        %v1628 = vadd.f32 %v1530, %v1590
        %v1629 = vadd.f32 %v1531, %v1592
        %v1630 = vadd.f32 %v1532, %v1594
        %v1631 = vadd.f32 %v1533, %v1596
        %v1632 = vadd.f32 %v1534, %v1598
        %v1633 = vadd.f32 %v1535, %v1600
        %v1634 = vadd.f32 %v1536, %v1602
        %s1635 = sld [smem:[#allocation2 + $0x8]]
        %v1636 = vstv %s1635
        %v1637 = vmul.f32 %v1636, %v1457
        %v1638 = vmul.f32 %v1636, %v1461
        %v1639 = vmul.f32 %v1636, %v1465
        %v1640 = vmul.f32 %v1636, %v1469
        %v1641 = vmul.f32 %v1636, %v1473
        %v1642 = vmul.f32 %v1636, %v1477
        %v1643 = vmul.f32 %v1636, %v1481
        %v1644 = vmul.f32 %v1636, %v1485
        %v1645 = vmul.f32 %v1636, %v1489
        %v1646 = vmul.f32 %v1636, %v1493
        %v1647 = vmul.f32 %v1636, %v1497
        %v1648 = vmul.f32 %v1636, %v1501
        %v1649 = vmul.f32 %v1636, %v1505
        %v1650 = vmul.f32 %v1636, %v1509
        %v1651 = vmul.f32 %v1636, %v1513
        %v1652 = vmul.f32 %v1636, %v1517
        %1669 = vrot.lane.b32.xlu0 %v1637, 126
        %v1670 = vpop.permute.xlu0 %1669
        %1671 = vrot.lane.b32.xlu0 %v1638, 126
        %v1672 = vpop.permute.xlu0 %1671
        %1673 = vrot.lane.b32.xlu0 %v1639, 126
        %v1674 = vpop.permute.xlu0 %1673
        %1675 = vrot.lane.b32.xlu0 %v1640, 126
        %v1676 = vpop.permute.xlu0 %1675
        %1677 = vrot.lane.b32.xlu0 %v1641, 126
        %v1678 = vpop.permute.xlu0 %1677
        %1679 = vrot.lane.b32.xlu0 %v1642, 126
        %v1680 = vpop.permute.xlu0 %1679
        %1681 = vrot.lane.b32.xlu0 %v1643, 126
        %v1682 = vpop.permute.xlu0 %1681
        %1683 = vrot.lane.b32.xlu0 %v1644, 126
        %v1684 = vpop.permute.xlu0 %1683
        %1685 = vrot.lane.b32.xlu0 %v1645, 126
        %v1686 = vpop.permute.xlu0 %1685
        %1687 = vrot.lane.b32.xlu0 %v1646, 126
        %v1688 = vpop.permute.xlu0 %1687
        %1689 = vrot.lane.b32.xlu0 %v1647, 126
        %v1690 = vpop.permute.xlu0 %1689
        %1691 = vrot.lane.b32.xlu0 %v1648, 126
        %v1692 = vpop.permute.xlu0 %1691
        %1693 = vrot.lane.b32.xlu0 %v1649, 126
        %v1694 = vpop.permute.xlu0 %1693
        %1695 = vrot.lane.b32.xlu0 %v1650, 126
        %v1696 = vpop.permute.xlu0 %1695
        %1697 = vrot.lane.b32.xlu0 %v1651, 126
        %v1698 = vpop.permute.xlu0 %1697
        %1699 = vrot.lane.b32.xlu0 %v1652, 126
        %v1700 = vpop.permute.xlu0 %1699
        %v1717 = vadd.f32 %v1619, %v1670
        %v1718 = vadd.f32 %v1620, %v1672
        %v1719 = vadd.f32 %v1621, %v1674
        %v1720 = vadd.f32 %v1622, %v1676
        %v1721 = vadd.f32 %v1623, %v1678
        %v1722 = vadd.f32 %v1624, %v1680
        %v1723 = vadd.f32 %v1625, %v1682
        %v1724 = vadd.f32 %v1626, %v1684
        %v1725 = vadd.f32 %v1627, %v1686
        %v1726 = vadd.f32 %v1628, %v1688
        %v1727 = vadd.f32 %v1629, %v1690
        %v1728 = vadd.f32 %v1630, %v1692
        %v1729 = vadd.f32 %v1631, %v1694
        %v1730 = vadd.f32 %v1632, %v1696
        %v1731 = vadd.f32 %v1633, %v1698
        %v1732 = vadd.f32 %v1634, %v1700
        %s1733 = sld [smem:[#allocation2 + $0x9]]
        %v1734 = vstv %s1733
        %v1735 = vmul.f32 %v1734, %v1457
        %v1736 = vmul.f32 %v1734, %v1461
        %v1737 = vmul.f32 %v1734, %v1465
        %v1738 = vmul.f32 %v1734, %v1469
        %v1739 = vmul.f32 %v1734, %v1473
        %v1740 = vmul.f32 %v1734, %v1477
        %v1741 = vmul.f32 %v1734, %v1481
        %v1742 = vmul.f32 %v1734, %v1485
        %v1743 = vmul.f32 %v1734, %v1489
        %v1744 = vmul.f32 %v1734, %v1493
        %v1745 = vmul.f32 %v1734, %v1497
        %v1746 = vmul.f32 %v1734, %v1501
        %v1747 = vmul.f32 %v1734, %v1505
        %v1748 = vmul.f32 %v1734, %v1509
        %v1749 = vmul.f32 %v1734, %v1513
        %v1750 = vmul.f32 %v1734, %v1517
        %1767 = vrot.lane.b32.xlu0 %v1735, 125
        %v1768 = vpop.permute.xlu0 %1767
        %1769 = vrot.lane.b32.xlu0 %v1736, 125
        %v1770 = vpop.permute.xlu0 %1769
        %1771 = vrot.lane.b32.xlu0 %v1737, 125
        %v1772 = vpop.permute.xlu0 %1771
        %1773 = vrot.lane.b32.xlu0 %v1738, 125
        %v1774 = vpop.permute.xlu0 %1773
        %1775 = vrot.lane.b32.xlu0 %v1739, 125
        %v1776 = vpop.permute.xlu0 %1775
        %1777 = vrot.lane.b32.xlu0 %v1740, 125
        %v1778 = vpop.permute.xlu0 %1777
        %1779 = vrot.lane.b32.xlu0 %v1741, 125
        %v1780 = vpop.permute.xlu0 %1779
        %1781 = vrot.lane.b32.xlu0 %v1742, 125
        %v1782 = vpop.permute.xlu0 %1781
        %1783 = vrot.lane.b32.xlu0 %v1743, 125
        %v1784 = vpop.permute.xlu0 %1783
        %1785 = vrot.lane.b32.xlu0 %v1744, 125
        %v1786 = vpop.permute.xlu0 %1785
        %1787 = vrot.lane.b32.xlu0 %v1745, 125
        %v1788 = vpop.permute.xlu0 %1787
        %1789 = vrot.lane.b32.xlu0 %v1746, 125
        %v1790 = vpop.permute.xlu0 %1789
        %1791 = vrot.lane.b32.xlu0 %v1747, 125
        %v1792 = vpop.permute.xlu0 %1791
        %1793 = vrot.lane.b32.xlu0 %v1748, 125
        %v1794 = vpop.permute.xlu0 %1793
        %1795 = vrot.lane.b32.xlu0 %v1749, 125
        %v1796 = vpop.permute.xlu0 %1795
        %1797 = vrot.lane.b32.xlu0 %v1750, 125
        %v1798 = vpop.permute.xlu0 %1797
        %v1815 = vadd.f32 %v1717, %v1768
        %v1816 = vadd.f32 %v1718, %v1770
        %v1817 = vadd.f32 %v1719, %v1772
        %v1818 = vadd.f32 %v1720, %v1774
        %v1819 = vadd.f32 %v1721, %v1776
        %v1820 = vadd.f32 %v1722, %v1778
        %v1821 = vadd.f32 %v1723, %v1780
        %v1822 = vadd.f32 %v1724, %v1782
        %v1823 = vadd.f32 %v1725, %v1784
        %v1824 = vadd.f32 %v1726, %v1786
        %v1825 = vadd.f32 %v1727, %v1788
        %v1826 = vadd.f32 %v1728, %v1790
        %v1827 = vadd.f32 %v1729, %v1792
        %v1828 = vadd.f32 %v1730, %v1794
        %v1829 = vadd.f32 %v1731, %v1796
        %v1830 = vadd.f32 %v1732, %v1798
        %s1831 = sld [smem:[#allocation2 + $0xa]]
        %v1832 = vstv %s1831
        %v1833 = vmul.f32 %v1832, %v1457
        %v1834 = vmul.f32 %v1832, %v1461
        %v1835 = vmul.f32 %v1832, %v1465
        %v1836 = vmul.f32 %v1832, %v1469
        %v1837 = vmul.f32 %v1832, %v1473
        %v1838 = vmul.f32 %v1832, %v1477
        %v1839 = vmul.f32 %v1832, %v1481
        %v1840 = vmul.f32 %v1832, %v1485
        %v1841 = vmul.f32 %v1832, %v1489
        %v1842 = vmul.f32 %v1832, %v1493
        %v1843 = vmul.f32 %v1832, %v1497
        %v1844 = vmul.f32 %v1832, %v1501
        %v1845 = vmul.f32 %v1832, %v1505
        %v1846 = vmul.f32 %v1832, %v1509
        %v1847 = vmul.f32 %v1832, %v1513
        %v1848 = vmul.f32 %v1832, %v1517
        %1865 = vrot.lane.b32.xlu0 %v1833, 124
        %v1866 = vpop.permute.xlu0 %1865
        %1867 = vrot.lane.b32.xlu0 %v1834, 124
        %v1868 = vpop.permute.xlu0 %1867
        %1869 = vrot.lane.b32.xlu0 %v1835, 124
        %v1870 = vpop.permute.xlu0 %1869
        %1871 = vrot.lane.b32.xlu0 %v1836, 124
        %v1872 = vpop.permute.xlu0 %1871
        %1873 = vrot.lane.b32.xlu0 %v1837, 124
        %v1874 = vpop.permute.xlu0 %1873
        %1875 = vrot.lane.b32.xlu0 %v1838, 124
        %v1876 = vpop.permute.xlu0 %1875
        %1877 = vrot.lane.b32.xlu0 %v1839, 124
        %v1878 = vpop.permute.xlu0 %1877
        %1879 = vrot.lane.b32.xlu0 %v1840, 124
        %v1880 = vpop.permute.xlu0 %1879
        %1881 = vrot.lane.b32.xlu0 %v1841, 124
        %v1882 = vpop.permute.xlu0 %1881
        %1883 = vrot.lane.b32.xlu0 %v1842, 124
        %v1884 = vpop.permute.xlu0 %1883
        %1885 = vrot.lane.b32.xlu0 %v1843, 124
        %v1886 = vpop.permute.xlu0 %1885
        %1887 = vrot.lane.b32.xlu0 %v1844, 124
        %v1888 = vpop.permute.xlu0 %1887
        %1889 = vrot.lane.b32.xlu0 %v1845, 124
        %v1890 = vpop.permute.xlu0 %1889
        %1891 = vrot.lane.b32.xlu0 %v1846, 124
        %v1892 = vpop.permute.xlu0 %1891
        %1893 = vrot.lane.b32.xlu0 %v1847, 124
        %v1894 = vpop.permute.xlu0 %1893
        %1895 = vrot.lane.b32.xlu0 %v1848, 124
        %v1896 = vpop.permute.xlu0 %1895
        %v1913 = vadd.f32 %v1815, %v1866
        %v1914 = vadd.f32 %v1816, %v1868
        %v1915 = vadd.f32 %v1817, %v1870
        %v1916 = vadd.f32 %v1818, %v1872
        %v1917 = vadd.f32 %v1819, %v1874
        %v1918 = vadd.f32 %v1820, %v1876
        %v1919 = vadd.f32 %v1821, %v1878
        %v1920 = vadd.f32 %v1822, %v1880
        %v1921 = vadd.f32 %v1823, %v1882
        %v1922 = vadd.f32 %v1824, %v1884
        %v1923 = vadd.f32 %v1825, %v1886
        %v1924 = vadd.f32 %v1826, %v1888
        %v1925 = vadd.f32 %v1827, %v1890
        %v1926 = vadd.f32 %v1828, %v1892
        %v1927 = vadd.f32 %v1829, %v1894
        %v1928 = vadd.f32 %v1830, %v1896
        %s1929 = sld [smem:[#allocation2 + $0xb]]
        %v1930 = vstv %s1929
        %v1931 = vadd.f32 %v1913, %v1930
        %v1932 = vadd.f32 %v1914, %v1930
        %v1933 = vadd.f32 %v1915, %v1930
        %v1934 = vadd.f32 %v1916, %v1930
        %v1935 = vadd.f32 %v1917, %v1930
        %v1936 = vadd.f32 %v1918, %v1930
        %v1937 = vadd.f32 %v1919, %v1930
        %v1938 = vadd.f32 %v1920, %v1930
        %v1939 = vadd.f32 %v1921, %v1930
        %v1940 = vadd.f32 %v1922, %v1930
        %v1941 = vadd.f32 %v1923, %v1930
        %v1942 = vadd.f32 %v1924, %v1930
        %v1943 = vadd.f32 %v1925, %v1930
        %v1944 = vadd.f32 %v1926, %v1930
        %v1945 = vadd.f32 %v1927, %v1930
        %v1946 = vadd.f32 %v1928, %v1930
        %v1947 = vmax.f32 %v1931, 0.0
        %v1948 = vmax.f32 %v1932, 0.0
        %v1949 = vmax.f32 %v1933, 0.0
        %v1950 = vmax.f32 %v1934, 0.0
        %v1951 = vmax.f32 %v1935, 0.0
        %v1952 = vmax.f32 %v1936, 0.0
        %v1953 = vmax.f32 %v1937, 0.0
        %v1954 = vmax.f32 %v1938, 0.0
        %v1955 = vmax.f32 %v1939, 0.0
        %v1956 = vmax.f32 %v1940, 0.0
        %v1957 = vmax.f32 %v1941, 0.0
        %v1958 = vmax.f32 %v1942, 0.0
        %v1959 = vmax.f32 %v1943, 0.0
        %v1960 = vmax.f32 %v1944, 0.0
        %v1961 = vmax.f32 %v1945, 0.0
        %v1962 = vmax.f32 %v1946, 0.0
        %1979 = vrot.lane.b32.xlu0 %v1947, 127
        %v1980 = vpop.permute.xlu0 %1979
        %1981 = vrot.lane.b32.xlu0 %v1948, 127
        %v1982 = vpop.permute.xlu0 %1981
        %1983 = vrot.lane.b32.xlu0 %v1949, 127
        %v1984 = vpop.permute.xlu0 %1983
        %1985 = vrot.lane.b32.xlu0 %v1950, 127
        %v1986 = vpop.permute.xlu0 %1985
        %1987 = vrot.lane.b32.xlu0 %v1951, 127
        %v1988 = vpop.permute.xlu0 %1987
        %1989 = vrot.lane.b32.xlu0 %v1952, 127
        %v1990 = vpop.permute.xlu0 %1989
        %1991 = vrot.lane.b32.xlu0 %v1953, 127
        %v1992 = vpop.permute.xlu0 %1991
        %1993 = vrot.lane.b32.xlu0 %v1954, 127
        %v1994 = vpop.permute.xlu0 %1993
        %1995 = vrot.lane.b32.xlu0 %v1955, 127
        %v1996 = vpop.permute.xlu0 %1995
        %1997 = vrot.lane.b32.xlu0 %v1956, 127
        %v1998 = vpop.permute.xlu0 %1997
        %1999 = vrot.lane.b32.xlu0 %v1957, 127
        %v2000 = vpop.permute.xlu0 %1999
        %2001 = vrot.lane.b32.xlu0 %v1958, 127
        %v2002 = vpop.permute.xlu0 %2001
        %2003 = vrot.lane.b32.xlu0 %v1959, 127
        %v2004 = vpop.permute.xlu0 %2003
        %2005 = vrot.lane.b32.xlu0 %v1960, 127
        %v2006 = vpop.permute.xlu0 %2005
        %2007 = vrot.lane.b32.xlu0 %v1961, 127
        %v2008 = vpop.permute.xlu0 %2007
        %2009 = vrot.lane.b32.xlu0 %v1962, 127
        %v2010 = vpop.permute.xlu0 %2009
        %v2027 = vmax.f32 %v1947, %v1980
        %v2028 = vmax.f32 %v1948, %v1982
        %v2029 = vmax.f32 %v1949, %v1984
        %v2030 = vmax.f32 %v1950, %v1986
        %v2031 = vmax.f32 %v1951, %v1988
        %v2032 = vmax.f32 %v1952, %v1990
        %v2033 = vmax.f32 %v1953, %v1992
        %v2034 = vmax.f32 %v1954, %v1994
        %v2035 = vmax.f32 %v1955, %v1996
        %v2036 = vmax.f32 %v1956, %v1998
        %v2037 = vmax.f32 %v1957, %v2000
        %v2038 = vmax.f32 %v1958, %v2002
        %v2039 = vmax.f32 %v1959, %v2004
        %v2040 = vmax.f32 %v1960, %v2006
        %v2041 = vmax.f32 %v1961, %v2008
        %v2042 = vmax.f32 %v1962, %v2010
        %v2043 = vld [vmem:[%s2] sm:$0xff]
        %v2044 = vld [vmem:[%s2 + $0x8] sm:$0xff]
        %v2045 = vld [vmem:[%s2 + $0x10] sm:$0xff]
        %v2046 = vld [vmem:[%s2 + $0x18] sm:$0x3]
        %v2047 = vperm.slane %v2046, 1
        %vm2048 = vcmask 203776
        %v2050 = vsel %vm2048, %v2027, 0
        %v2053 = vsel %vm2048, %v2028, 0
        %v2056 = vsel %vm2048, %v2029, 0
        %v2059 = vsel %vm2048, %v2030, 0
        %v2062 = vsel %vm2048, %v2031, 0
        %v2065 = vsel %vm2048, %v2032, 0
        %v2068 = vsel %vm2048, %v2033, 0
        %v2071 = vsel %vm2048, %v2034, 0
        %v2074 = vsel %vm2048, %v2035, 0
        %v2077 = vsel %vm2048, %v2036, 0
        %v2080 = vsel %vm2048, %v2037, 0
        %v2083 = vsel %vm2048, %v2038, 0
        %v2086 = vsel %vm2048, %v2039, 0
        %v2089 = vsel %vm2048, %v2040, 0
        %v2092 = vsel %vm2048, %v2041, 0
        %v2095 = vsel %vm2048, %v2042, 0
        %vm2097 = vcmask 1040384
        %v2099 = vsel %vm2097, %v2046, 0
        %2101 = vmatpush.msra.mxu0 0.0
        %2102 = vmatpush.msra.mxu0 0.0
        %2103 = vmatpush.msra.mxu0 0.0
        %2104 = vmatpush.msra.mxu0 0.0
        %2105 = vmatpush.msra.mxu0 0.0
        %2106 = vmatpush.msra.mxu0 0.0
        %2107 = vmatpush.msra.mxu0 0.0
        %2108 = vmatpush.msra.mxu0 0.0
        %2109 = vmatpush.msra.mxu0 0.0
        %2110 = vmatpush.msra.mxu0 0.0
        %2111 = vmatpush.msra.mxu0 0.0
        %2112 = vmatpush.msra.mxu0 0.0
        %v2113 = vand.u32 %v2099, 4294901760
        %2114 = vmatpush.msra.mxu0 %v2113
        %v2115 = vand.u32 %v2045, 4294901760
        %2116 = vmatpush.msra.mxu0 %v2115
        %v2117 = vand.u32 %v2044, 4294901760
        %2118 = vmatpush.msra.mxu0 %v2117
        %v2119 = vand.u32 %v2043, 4294901760
        %2120 = vmatpush.msra.mxu0 %v2119
        %v2121 = vand.u32 %v2050, 4294901760
        %v2122 = vsub.f32 %v2050, %v2121
        %v2123 = vand.u32 %v2122, 4294901760
        %v2124 = vsub.f32 %v2122, %v2123
        %v2125 = vand.u32 %v2124, 4294901760
        %2126 = vmatmul.f32.gmra.mxu0 %v2125
        %v2127 = vpop.f32.mrf.mxu0
        %v2128 = vadd.f32 %v2047, %v2127
        %v2129 = vand.u32 %v2053, 4294901760
        %v2130 = vsub.f32 %v2053, %v2129
        %v2131 = vand.u32 %v2130, 4294901760
        %v2132 = vsub.f32 %v2130, %v2131
        %v2133 = vand.u32 %v2132, 4294901760
        %2134 = vmatmul.f32.gmra.mxu0 %v2133
        %v2135 = vpop.f32.mrf.mxu0
        %v2136 = vadd.f32 %v2047, %v2135
        %v2137 = vand.u32 %v2056, 4294901760
        %v2138 = vsub.f32 %v2056, %v2137
        %v2139 = vand.u32 %v2138, 4294901760
        %v2140 = vsub.f32 %v2138, %v2139
        %v2141 = vand.u32 %v2140, 4294901760
        %2142 = vmatmul.f32.gmra.mxu0 %v2141
        %v2143 = vpop.f32.mrf.mxu0
        %v2144 = vadd.f32 %v2047, %v2143
        %v2145 = vand.u32 %v2059, 4294901760
        %v2146 = vsub.f32 %v2059, %v2145
        %v2147 = vand.u32 %v2146, 4294901760
        %v2148 = vsub.f32 %v2146, %v2147
        %v2149 = vand.u32 %v2148, 4294901760
        %2150 = vmatmul.f32.gmra.mxu0 %v2149
        %v2151 = vpop.f32.mrf.mxu0
        %v2152 = vadd.f32 %v2047, %v2151
        %v2153 = vand.u32 %v2062, 4294901760
        %v2154 = vsub.f32 %v2062, %v2153
        %v2155 = vand.u32 %v2154, 4294901760
        %v2156 = vsub.f32 %v2154, %v2155
        %v2157 = vand.u32 %v2156, 4294901760
        %2158 = vmatmul.f32.gmra.mxu0 %v2157
        %v2159 = vpop.f32.mrf.mxu0
        %v2160 = vadd.f32 %v2047, %v2159
        %v2161 = vand.u32 %v2065, 4294901760
        %v2162 = vsub.f32 %v2065, %v2161
        %v2163 = vand.u32 %v2162, 4294901760
        %v2164 = vsub.f32 %v2162, %v2163
        %v2165 = vand.u32 %v2164, 4294901760
        %2166 = vmatmul.f32.gmra.mxu0 %v2165
        %v2167 = vpop.f32.mrf.mxu0
        %v2168 = vadd.f32 %v2047, %v2167
        %v2169 = vand.u32 %v2068, 4294901760
        %v2170 = vsub.f32 %v2068, %v2169
        %v2171 = vand.u32 %v2170, 4294901760
        %v2172 = vsub.f32 %v2170, %v2171
        %v2173 = vand.u32 %v2172, 4294901760
        %2174 = vmatmul.f32.gmra.mxu0 %v2173
        %v2175 = vpop.f32.mrf.mxu0
        %v2176 = vadd.f32 %v2047, %v2175
        %v2177 = vand.u32 %v2071, 4294901760
        %v2178 = vsub.f32 %v2071, %v2177
        %v2179 = vand.u32 %v2178, 4294901760
        %v2180 = vsub.f32 %v2178, %v2179
        %v2181 = vand.u32 %v2180, 4294901760
        %2182 = vmatmul.f32.gmra.mxu0 %v2181
        %v2183 = vpop.f32.mrf.mxu0
        %v2184 = vadd.f32 %v2047, %v2183
        %v2185 = vand.u32 %v2074, 4294901760
        %v2186 = vsub.f32 %v2074, %v2185
        %v2187 = vand.u32 %v2186, 4294901760
        %v2188 = vsub.f32 %v2186, %v2187
        %v2189 = vand.u32 %v2188, 4294901760
        %2190 = vmatmul.f32.gmra.mxu0 %v2189
        %v2191 = vpop.f32.mrf.mxu0
        %v2192 = vadd.f32 %v2047, %v2191
        %v2193 = vand.u32 %v2077, 4294901760
        %v2194 = vsub.f32 %v2077, %v2193
        %v2195 = vand.u32 %v2194, 4294901760
        %v2196 = vsub.f32 %v2194, %v2195
        %v2197 = vand.u32 %v2196, 4294901760
        %2198 = vmatmul.f32.gmra.mxu0 %v2197
        %v2199 = vpop.f32.mrf.mxu0
        %v2200 = vadd.f32 %v2047, %v2199
        %v2201 = vand.u32 %v2080, 4294901760
        %v2202 = vsub.f32 %v2080, %v2201
        %v2203 = vand.u32 %v2202, 4294901760
        %v2204 = vsub.f32 %v2202, %v2203
        %v2205 = vand.u32 %v2204, 4294901760
        %2206 = vmatmul.f32.gmra.mxu0 %v2205
        %v2207 = vpop.f32.mrf.mxu0
        %v2208 = vadd.f32 %v2047, %v2207
        %v2209 = vand.u32 %v2083, 4294901760
        %v2210 = vsub.f32 %v2083, %v2209
        %v2211 = vand.u32 %v2210, 4294901760
        %v2212 = vsub.f32 %v2210, %v2211
        %v2213 = vand.u32 %v2212, 4294901760
        %2214 = vmatmul.f32.gmra.mxu0 %v2213
        %v2215 = vpop.f32.mrf.mxu0
        %v2216 = vadd.f32 %v2047, %v2215
        %v2217 = vand.u32 %v2086, 4294901760
        %v2218 = vsub.f32 %v2086, %v2217
        %v2219 = vand.u32 %v2218, 4294901760
        %v2220 = vsub.f32 %v2218, %v2219
        %v2221 = vand.u32 %v2220, 4294901760
        %2222 = vmatmul.f32.gmra.mxu0 %v2221
        %v2223 = vpop.f32.mrf.mxu0
        %v2224 = vadd.f32 %v2047, %v2223
        %v2225 = vand.u32 %v2089, 4294901760
        %v2226 = vsub.f32 %v2089, %v2225
        %v2227 = vand.u32 %v2226, 4294901760
        %v2228 = vsub.f32 %v2226, %v2227
        %v2229 = vand.u32 %v2228, 4294901760
        %2230 = vmatmul.f32.gmra.mxu0 %v2229
        %v2231 = vpop.f32.mrf.mxu0
        %v2232 = vadd.f32 %v2047, %v2231
        %v2233 = vand.u32 %v2092, 4294901760
        %v2234 = vsub.f32 %v2092, %v2233
        %v2235 = vand.u32 %v2234, 4294901760
        %v2236 = vsub.f32 %v2234, %v2235
        %v2237 = vand.u32 %v2236, 4294901760
        %2238 = vmatmul.f32.gmra.mxu0 %v2237
        %v2239 = vpop.f32.mrf.mxu0
        %v2240 = vadd.f32 %v2047, %v2239
        %v2241 = vand.u32 %v2095, 4294901760
        %v2242 = vsub.f32 %v2095, %v2241
        %v2243 = vand.u32 %v2242, 4294901760
        %v2244 = vsub.f32 %v2242, %v2243
        %v2245 = vand.u32 %v2244, 4294901760
        %2246 = vmatmul.f32.gmra.mxu0 %v2245
        %v2247 = vpop.f32.mrf.mxu0
        %v2248 = vadd.f32 %v2047, %v2247
        %2249 = vdwg.mxu0
        %2250 = vmatpush.msra.mxu0 0.0
        %2251 = vmatpush.msra.mxu0 0.0
        %2252 = vmatpush.msra.mxu0 0.0
        %2253 = vmatpush.msra.mxu0 0.0
        %2254 = vmatpush.msra.mxu0 0.0
        %2255 = vmatpush.msra.mxu0 0.0
        %2256 = vmatpush.msra.mxu0 0.0
        %2257 = vmatpush.msra.mxu0 0.0
        %2258 = vmatpush.msra.mxu0 0.0
        %2259 = vmatpush.msra.mxu0 0.0
        %2260 = vmatpush.msra.mxu0 0.0
        %2261 = vmatpush.msra.mxu0 0.0
        %v2262 = vand.u32 %v2099, 4294901760
        %v2263 = vsub.f32 %v2099, %v2262
        %v2264 = vand.u32 %v2263, 4294901760
        %v2265 = vsub.f32 %v2263, %v2264
        %v2266 = vand.u32 %v2265, 4294901760
        %2267 = vmatpush.msra.mxu0 %v2266
        %v2268 = vand.u32 %v2045, 4294901760
        %v2269 = vsub.f32 %v2045, %v2268
        %v2270 = vand.u32 %v2269, 4294901760
        %v2271 = vsub.f32 %v2269, %v2270
        %v2272 = vand.u32 %v2271, 4294901760
        %2273 = vmatpush.msra.mxu0 %v2272
        %v2274 = vand.u32 %v2044, 4294901760
        %v2275 = vsub.f32 %v2044, %v2274
        %v2276 = vand.u32 %v2275, 4294901760
        %v2277 = vsub.f32 %v2275, %v2276
        %v2278 = vand.u32 %v2277, 4294901760
        %2279 = vmatpush.msra.mxu0 %v2278
        %v2280 = vand.u32 %v2043, 4294901760
        %v2281 = vsub.f32 %v2043, %v2280
        %v2282 = vand.u32 %v2281, 4294901760
        %v2283 = vsub.f32 %v2281, %v2282
        %v2284 = vand.u32 %v2283, 4294901760
        %2285 = vmatpush.msra.mxu0 %v2284
        %v2286 = vand.u32 %v2050, 4294901760
        %2287 = vmatmul.f32.gmra.mxu0 %v2286
        %v2288 = vpop.f32.mrf.mxu0
        %v2289 = vadd.f32 %v2128, %v2288
        %v2290 = vand.u32 %v2053, 4294901760
        %2291 = vmatmul.f32.gmra.mxu0 %v2290
        %v2292 = vpop.f32.mrf.mxu0
        %v2293 = vadd.f32 %v2136, %v2292
        %v2294 = vand.u32 %v2056, 4294901760
        %2295 = vmatmul.f32.gmra.mxu0 %v2294
        %v2296 = vpop.f32.mrf.mxu0
        %v2297 = vadd.f32 %v2144, %v2296
        %v2298 = vand.u32 %v2059, 4294901760
        %2299 = vmatmul.f32.gmra.mxu0 %v2298
        %v2300 = vpop.f32.mrf.mxu0
        %v2301 = vadd.f32 %v2152, %v2300
        %v2302 = vand.u32 %v2062, 4294901760
        %2303 = vmatmul.f32.gmra.mxu0 %v2302
        %v2304 = vpop.f32.mrf.mxu0
        %v2305 = vadd.f32 %v2160, %v2304
        %v2306 = vand.u32 %v2065, 4294901760
        %2307 = vmatmul.f32.gmra.mxu0 %v2306
        %v2308 = vpop.f32.mrf.mxu0
        %v2309 = vadd.f32 %v2168, %v2308
        %v2310 = vand.u32 %v2068, 4294901760
        %2311 = vmatmul.f32.gmra.mxu0 %v2310
        %v2312 = vpop.f32.mrf.mxu0
        %v2313 = vadd.f32 %v2176, %v2312
        %v2314 = vand.u32 %v2071, 4294901760
        %2315 = vmatmul.f32.gmra.mxu0 %v2314
        %v2316 = vpop.f32.mrf.mxu0
        %v2317 = vadd.f32 %v2184, %v2316
        %v2318 = vand.u32 %v2074, 4294901760
        %2319 = vmatmul.f32.gmra.mxu0 %v2318
        %v2320 = vpop.f32.mrf.mxu0
        %v2321 = vadd.f32 %v2192, %v2320
        %v2322 = vand.u32 %v2077, 4294901760
        %2323 = vmatmul.f32.gmra.mxu0 %v2322
        %v2324 = vpop.f32.mrf.mxu0
        %v2325 = vadd.f32 %v2200, %v2324
        %v2326 = vand.u32 %v2080, 4294901760
        %2327 = vmatmul.f32.gmra.mxu0 %v2326
        %v2328 = vpop.f32.mrf.mxu0
        %v2329 = vadd.f32 %v2208, %v2328
        %v2330 = vand.u32 %v2083, 4294901760
        %2331 = vmatmul.f32.gmra.mxu0 %v2330
        %v2332 = vpop.f32.mrf.mxu0
        %v2333 = vadd.f32 %v2216, %v2332
        %v2334 = vand.u32 %v2086, 4294901760
        %2335 = vmatmul.f32.gmra.mxu0 %v2334
        %v2336 = vpop.f32.mrf.mxu0
        %v2337 = vadd.f32 %v2224, %v2336
        %v2338 = vand.u32 %v2089, 4294901760
        %2339 = vmatmul.f32.gmra.mxu0 %v2338
        %v2340 = vpop.f32.mrf.mxu0
        %v2341 = vadd.f32 %v2232, %v2340
        %v2342 = vand.u32 %v2092, 4294901760
        %2343 = vmatmul.f32.gmra.mxu0 %v2342
        %v2344 = vpop.f32.mrf.mxu0
        %v2345 = vadd.f32 %v2240, %v2344
        %v2346 = vand.u32 %v2095, 4294901760
        %2347 = vmatmul.f32.gmra.mxu0 %v2346
        %v2348 = vpop.f32.mrf.mxu0
        %v2349 = vadd.f32 %v2248, %v2348
        %2350 = vdwg.mxu0
        %2351 = vmatpush.msra.mxu0 0.0
        %2352 = vmatpush.msra.mxu0 0.0
        %2353 = vmatpush.msra.mxu0 0.0
        %2354 = vmatpush.msra.mxu0 0.0
        %2355 = vmatpush.msra.mxu0 0.0
        %2356 = vmatpush.msra.mxu0 0.0
        %2357 = vmatpush.msra.mxu0 0.0
        %2358 = vmatpush.msra.mxu0 0.0
        %2359 = vmatpush.msra.mxu0 0.0
        %2360 = vmatpush.msra.mxu0 0.0
        %2361 = vmatpush.msra.mxu0 0.0
        %2362 = vmatpush.msra.mxu0 0.0
        %v2363 = vand.u32 %v2099, 4294901760
        %v2364 = vsub.f32 %v2099, %v2363
        %2365 = vmatpush.msra.mxu0 %v2364
        %v2366 = vand.u32 %v2045, 4294901760
        %v2367 = vsub.f32 %v2045, %v2366
        %2368 = vmatpush.msra.mxu0 %v2367
        %v2369 = vand.u32 %v2044, 4294901760
        %v2370 = vsub.f32 %v2044, %v2369
        %2371 = vmatpush.msra.mxu0 %v2370
        %v2372 = vand.u32 %v2043, 4294901760
        %v2373 = vsub.f32 %v2043, %v2372
        %2374 = vmatpush.msra.mxu0 %v2373
        %v2375 = vand.u32 %v2050, 4294901760
        %v2376 = vsub.f32 %v2050, %v2375
        %2377 = vmatmul.f32.gmra.mxu0 %v2376
        %v2378 = vpop.f32.mrf.mxu0
        %v2379 = vadd.f32 %v2289, %v2378
        %v2380 = vand.u32 %v2053, 4294901760
        %v2381 = vsub.f32 %v2053, %v2380
        %2382 = vmatmul.f32.gmra.mxu0 %v2381
        %v2383 = vpop.f32.mrf.mxu0
        %v2384 = vadd.f32 %v2293, %v2383
        %v2385 = vand.u32 %v2056, 4294901760
        %v2386 = vsub.f32 %v2056, %v2385
        %2387 = vmatmul.f32.gmra.mxu0 %v2386
        %v2388 = vpop.f32.mrf.mxu0
        %v2389 = vadd.f32 %v2297, %v2388
        %v2390 = vand.u32 %v2059, 4294901760
        %v2391 = vsub.f32 %v2059, %v2390
        %2392 = vmatmul.f32.gmra.mxu0 %v2391
        %v2393 = vpop.f32.mrf.mxu0
        %v2394 = vadd.f32 %v2301, %v2393
        %v2395 = vand.u32 %v2062, 4294901760
        %v2396 = vsub.f32 %v2062, %v2395
        %2397 = vmatmul.f32.gmra.mxu0 %v2396
        %v2398 = vpop.f32.mrf.mxu0
        %v2399 = vadd.f32 %v2305, %v2398
        %v2400 = vand.u32 %v2065, 4294901760
        %v2401 = vsub.f32 %v2065, %v2400
        %2402 = vmatmul.f32.gmra.mxu0 %v2401
        %v2403 = vpop.f32.mrf.mxu0
        %v2404 = vadd.f32 %v2309, %v2403
        %v2405 = vand.u32 %v2068, 4294901760
        %v2406 = vsub.f32 %v2068, %v2405
        %2407 = vmatmul.f32.gmra.mxu0 %v2406
        %v2408 = vpop.f32.mrf.mxu0
        %v2409 = vadd.f32 %v2313, %v2408
        %v2410 = vand.u32 %v2071, 4294901760
        %v2411 = vsub.f32 %v2071, %v2410
        %2412 = vmatmul.f32.gmra.mxu0 %v2411
        %v2413 = vpop.f32.mrf.mxu0
        %v2414 = vadd.f32 %v2317, %v2413
        %v2415 = vand.u32 %v2074, 4294901760
        %v2416 = vsub.f32 %v2074, %v2415
        %2417 = vmatmul.f32.gmra.mxu0 %v2416
        %v2418 = vpop.f32.mrf.mxu0
        %v2419 = vadd.f32 %v2321, %v2418
        %v2420 = vand.u32 %v2077, 4294901760
        %v2421 = vsub.f32 %v2077, %v2420
        %2422 = vmatmul.f32.gmra.mxu0 %v2421
        %v2423 = vpop.f32.mrf.mxu0
        %v2424 = vadd.f32 %v2325, %v2423
        %v2425 = vand.u32 %v2080, 4294901760
        %v2426 = vsub.f32 %v2080, %v2425
        %2427 = vmatmul.f32.gmra.mxu0 %v2426
        %v2428 = vpop.f32.mrf.mxu0
        %v2429 = vadd.f32 %v2329, %v2428
        %v2430 = vand.u32 %v2083, 4294901760
        %v2431 = vsub.f32 %v2083, %v2430
        %2432 = vmatmul.f32.gmra.mxu0 %v2431
        %v2433 = vpop.f32.mrf.mxu0
        %v2434 = vadd.f32 %v2333, %v2433
        %v2435 = vand.u32 %v2086, 4294901760
        %v2436 = vsub.f32 %v2086, %v2435
        %2437 = vmatmul.f32.gmra.mxu0 %v2436
        %v2438 = vpop.f32.mrf.mxu0
        %v2439 = vadd.f32 %v2337, %v2438
        %v2440 = vand.u32 %v2089, 4294901760
        %v2441 = vsub.f32 %v2089, %v2440
        %2442 = vmatmul.f32.gmra.mxu0 %v2441
        %v2443 = vpop.f32.mrf.mxu0
        %v2444 = vadd.f32 %v2341, %v2443
        %v2445 = vand.u32 %v2092, 4294901760
        %v2446 = vsub.f32 %v2092, %v2445
        %2447 = vmatmul.f32.gmra.mxu0 %v2446
        %v2448 = vpop.f32.mrf.mxu0
        %v2449 = vadd.f32 %v2345, %v2448
        %v2450 = vand.u32 %v2095, 4294901760
        %v2451 = vsub.f32 %v2095, %v2450
        %2452 = vmatmul.f32.gmra.mxu0 %v2451
        %v2453 = vpop.f32.mrf.mxu0
        %v2454 = vadd.f32 %v2349, %v2453
        %2455 = vdwg.mxu0
        %2456 = vmatpush.msra.mxu0 0.0
        %2457 = vmatpush.msra.mxu0 0.0
        %2458 = vmatpush.msra.mxu0 0.0
        %2459 = vmatpush.msra.mxu0 0.0
        %2460 = vmatpush.msra.mxu0 0.0
        %2461 = vmatpush.msra.mxu0 0.0
        %2462 = vmatpush.msra.mxu0 0.0
        %2463 = vmatpush.msra.mxu0 0.0
        %2464 = vmatpush.msra.mxu0 0.0
        %2465 = vmatpush.msra.mxu0 0.0
        %2466 = vmatpush.msra.mxu0 0.0
        %2467 = vmatpush.msra.mxu0 0.0
        %v2468 = vand.u32 %v2099, 4294901760
        %2469 = vmatpush.msra.mxu0 %v2468
        %v2470 = vand.u32 %v2045, 4294901760
        %2471 = vmatpush.msra.mxu0 %v2470
        %v2472 = vand.u32 %v2044, 4294901760
        %2473 = vmatpush.msra.mxu0 %v2472
        %v2474 = vand.u32 %v2043, 4294901760
        %2475 = vmatpush.msra.mxu0 %v2474
        %v2476 = vand.u32 %v2050, 4294901760
        %v2477 = vsub.f32 %v2050, %v2476
        %v2478 = vand.u32 %v2477, 4294901760
        %2479 = vmatmul.f32.gmra.mxu0 %v2478
        %v2480 = vpop.f32.mrf.mxu0
        %v2481 = vadd.f32 %v2379, %v2480
        %v2482 = vand.u32 %v2053, 4294901760
        %v2483 = vsub.f32 %v2053, %v2482
        %v2484 = vand.u32 %v2483, 4294901760
        %2485 = vmatmul.f32.gmra.mxu0 %v2484
        %v2486 = vpop.f32.mrf.mxu0
        %v2487 = vadd.f32 %v2384, %v2486
        %v2488 = vand.u32 %v2056, 4294901760
        %v2489 = vsub.f32 %v2056, %v2488
        %v2490 = vand.u32 %v2489, 4294901760
        %2491 = vmatmul.f32.gmra.mxu0 %v2490
        %v2492 = vpop.f32.mrf.mxu0
        %v2493 = vadd.f32 %v2389, %v2492
        %v2494 = vand.u32 %v2059, 4294901760
        %v2495 = vsub.f32 %v2059, %v2494
        %v2496 = vand.u32 %v2495, 4294901760
        %2497 = vmatmul.f32.gmra.mxu0 %v2496
        %v2498 = vpop.f32.mrf.mxu0
        %v2499 = vadd.f32 %v2394, %v2498
        %v2500 = vand.u32 %v2062, 4294901760
        %v2501 = vsub.f32 %v2062, %v2500
        %v2502 = vand.u32 %v2501, 4294901760
        %2503 = vmatmul.f32.gmra.mxu0 %v2502
        %v2504 = vpop.f32.mrf.mxu0
        %v2505 = vadd.f32 %v2399, %v2504
        %v2506 = vand.u32 %v2065, 4294901760
        %v2507 = vsub.f32 %v2065, %v2506
        %v2508 = vand.u32 %v2507, 4294901760
        %2509 = vmatmul.f32.gmra.mxu0 %v2508
        %v2510 = vpop.f32.mrf.mxu0
        %v2511 = vadd.f32 %v2404, %v2510
        %v2512 = vand.u32 %v2068, 4294901760
        %v2513 = vsub.f32 %v2068, %v2512
        %v2514 = vand.u32 %v2513, 4294901760
        %2515 = vmatmul.f32.gmra.mxu0 %v2514
        %v2516 = vpop.f32.mrf.mxu0
        %v2517 = vadd.f32 %v2409, %v2516
        %v2518 = vand.u32 %v2071, 4294901760
        %v2519 = vsub.f32 %v2071, %v2518
        %v2520 = vand.u32 %v2519, 4294901760
        %2521 = vmatmul.f32.gmra.mxu0 %v2520
        %v2522 = vpop.f32.mrf.mxu0
        %v2523 = vadd.f32 %v2414, %v2522
        %v2524 = vand.u32 %v2074, 4294901760
        %v2525 = vsub.f32 %v2074, %v2524
        %v2526 = vand.u32 %v2525, 4294901760
        %2527 = vmatmul.f32.gmra.mxu0 %v2526
        %v2528 = vpop.f32.mrf.mxu0
        %v2529 = vadd.f32 %v2419, %v2528
        %v2530 = vand.u32 %v2077, 4294901760
        %v2531 = vsub.f32 %v2077, %v2530
        %v2532 = vand.u32 %v2531, 4294901760
        %2533 = vmatmul.f32.gmra.mxu0 %v2532
        %v2534 = vpop.f32.mrf.mxu0
        %v2535 = vadd.f32 %v2424, %v2534
        %v2536 = vand.u32 %v2080, 4294901760
        %v2537 = vsub.f32 %v2080, %v2536
        %v2538 = vand.u32 %v2537, 4294901760
        %2539 = vmatmul.f32.gmra.mxu0 %v2538
        %v2540 = vpop.f32.mrf.mxu0
        %v2541 = vadd.f32 %v2429, %v2540
        %v2542 = vand.u32 %v2083, 4294901760
        %v2543 = vsub.f32 %v2083, %v2542
        %v2544 = vand.u32 %v2543, 4294901760
        %2545 = vmatmul.f32.gmra.mxu0 %v2544
        %v2546 = vpop.f32.mrf.mxu0
        %v2547 = vadd.f32 %v2434, %v2546
        %v2548 = vand.u32 %v2086, 4294901760
        %v2549 = vsub.f32 %v2086, %v2548
        %v2550 = vand.u32 %v2549, 4294901760
        %2551 = vmatmul.f32.gmra.mxu0 %v2550
        %v2552 = vpop.f32.mrf.mxu0
        %v2553 = vadd.f32 %v2439, %v2552
        %v2554 = vand.u32 %v2089, 4294901760
        %v2555 = vsub.f32 %v2089, %v2554
        %v2556 = vand.u32 %v2555, 4294901760
        %2557 = vmatmul.f32.gmra.mxu0 %v2556
        %v2558 = vpop.f32.mrf.mxu0
        %v2559 = vadd.f32 %v2444, %v2558
        %v2560 = vand.u32 %v2092, 4294901760
        %v2561 = vsub.f32 %v2092, %v2560
        %v2562 = vand.u32 %v2561, 4294901760
        %2563 = vmatmul.f32.gmra.mxu0 %v2562
        %v2564 = vpop.f32.mrf.mxu0
        %v2565 = vadd.f32 %v2449, %v2564
        %v2566 = vand.u32 %v2095, 4294901760
        %v2567 = vsub.f32 %v2095, %v2566
        %v2568 = vand.u32 %v2567, 4294901760
        %2569 = vmatmul.f32.gmra.mxu0 %v2568
        %v2570 = vpop.f32.mrf.mxu0
        %v2571 = vadd.f32 %v2454, %v2570
        %2572 = vdwg.mxu0
        %2573 = vmatpush.msra.mxu0 0.0
        %2574 = vmatpush.msra.mxu0 0.0
        %2575 = vmatpush.msra.mxu0 0.0
        %2576 = vmatpush.msra.mxu0 0.0
        %2577 = vmatpush.msra.mxu0 0.0
        %2578 = vmatpush.msra.mxu0 0.0
        %2579 = vmatpush.msra.mxu0 0.0
        %2580 = vmatpush.msra.mxu0 0.0
        %2581 = vmatpush.msra.mxu0 0.0
        %2582 = vmatpush.msra.mxu0 0.0
        %2583 = vmatpush.msra.mxu0 0.0
        %2584 = vmatpush.msra.mxu0 0.0
        %v2585 = vand.u32 %v2099, 4294901760
        %v2586 = vsub.f32 %v2099, %v2585
        %v2587 = vand.u32 %v2586, 4294901760
        %2588 = vmatpush.msra.mxu0 %v2587
        %v2589 = vand.u32 %v2045, 4294901760
        %v2590 = vsub.f32 %v2045, %v2589
        %v2591 = vand.u32 %v2590, 4294901760
        %2592 = vmatpush.msra.mxu0 %v2591
        %v2593 = vand.u32 %v2044, 4294901760
        %v2594 = vsub.f32 %v2044, %v2593
        %v2595 = vand.u32 %v2594, 4294901760
        %2596 = vmatpush.msra.mxu0 %v2595
        %v2597 = vand.u32 %v2043, 4294901760
        %v2598 = vsub.f32 %v2043, %v2597
        %v2599 = vand.u32 %v2598, 4294901760
        %2600 = vmatpush.msra.mxu0 %v2599
        %v2601 = vand.u32 %v2050, 4294901760
        %2602 = vmatmul.f32.gmra.mxu0 %v2601
        %v2603 = vpop.f32.mrf.mxu0
        %v2604 = vadd.f32 %v2481, %v2603
        %v2605 = vand.u32 %v2053, 4294901760
        %2606 = vmatmul.f32.gmra.mxu0 %v2605
        %v2607 = vpop.f32.mrf.mxu0
        %v2608 = vadd.f32 %v2487, %v2607
        %v2609 = vand.u32 %v2056, 4294901760
        %2610 = vmatmul.f32.gmra.mxu0 %v2609
        %v2611 = vpop.f32.mrf.mxu0
        %v2612 = vadd.f32 %v2493, %v2611
        %v2613 = vand.u32 %v2059, 4294901760
        %2614 = vmatmul.f32.gmra.mxu0 %v2613
        %v2615 = vpop.f32.mrf.mxu0
        %v2616 = vadd.f32 %v2499, %v2615
        %v2617 = vand.u32 %v2062, 4294901760
        %2618 = vmatmul.f32.gmra.mxu0 %v2617
        %v2619 = vpop.f32.mrf.mxu0
        %v2620 = vadd.f32 %v2505, %v2619
        %v2621 = vand.u32 %v2065, 4294901760
        %2622 = vmatmul.f32.gmra.mxu0 %v2621
        %v2623 = vpop.f32.mrf.mxu0
        %v2624 = vadd.f32 %v2511, %v2623
        %v2625 = vand.u32 %v2068, 4294901760
        %2626 = vmatmul.f32.gmra.mxu0 %v2625
        %v2627 = vpop.f32.mrf.mxu0
        %v2628 = vadd.f32 %v2517, %v2627
        %v2629 = vand.u32 %v2071, 4294901760
        %2630 = vmatmul.f32.gmra.mxu0 %v2629
        %v2631 = vpop.f32.mrf.mxu0
        %v2632 = vadd.f32 %v2523, %v2631
        %v2633 = vand.u32 %v2074, 4294901760
        %2634 = vmatmul.f32.gmra.mxu0 %v2633
        %v2635 = vpop.f32.mrf.mxu0
        %v2636 = vadd.f32 %v2529, %v2635
        %v2637 = vand.u32 %v2077, 4294901760
        %2638 = vmatmul.f32.gmra.mxu0 %v2637
        %v2639 = vpop.f32.mrf.mxu0
        %v2640 = vadd.f32 %v2535, %v2639
        %v2641 = vand.u32 %v2080, 4294901760
        %2642 = vmatmul.f32.gmra.mxu0 %v2641
        %v2643 = vpop.f32.mrf.mxu0
        %v2644 = vadd.f32 %v2541, %v2643
        %v2645 = vand.u32 %v2083, 4294901760
        %2646 = vmatmul.f32.gmra.mxu0 %v2645
        %v2647 = vpop.f32.mrf.mxu0
        %v2648 = vadd.f32 %v2547, %v2647
        %v2649 = vand.u32 %v2086, 4294901760
        %2650 = vmatmul.f32.gmra.mxu0 %v2649
        %v2651 = vpop.f32.mrf.mxu0
        %v2652 = vadd.f32 %v2553, %v2651
        %v2653 = vand.u32 %v2089, 4294901760
        %2654 = vmatmul.f32.gmra.mxu0 %v2653
        %v2655 = vpop.f32.mrf.mxu0
        %v2656 = vadd.f32 %v2559, %v2655
        %v2657 = vand.u32 %v2092, 4294901760
        %2658 = vmatmul.f32.gmra.mxu0 %v2657
        %v2659 = vpop.f32.mrf.mxu0
        %v2660 = vadd.f32 %v2565, %v2659
        %v2661 = vand.u32 %v2095, 4294901760
        %2662 = vmatmul.f32.gmra.mxu0 %v2661
        %v2663 = vpop.f32.mrf.mxu0
        %v2664 = vadd.f32 %v2571, %v2663
        %2665 = vdwg.mxu0
        %2666 = vmatpush.msra.mxu0 0.0
        %2667 = vmatpush.msra.mxu0 0.0
        %2668 = vmatpush.msra.mxu0 0.0
        %2669 = vmatpush.msra.mxu0 0.0
        %2670 = vmatpush.msra.mxu0 0.0
        %2671 = vmatpush.msra.mxu0 0.0
        %2672 = vmatpush.msra.mxu0 0.0
        %2673 = vmatpush.msra.mxu0 0.0
        %2674 = vmatpush.msra.mxu0 0.0
        %2675 = vmatpush.msra.mxu0 0.0
        %2676 = vmatpush.msra.mxu0 0.0
        %2677 = vmatpush.msra.mxu0 0.0
        %v2678 = vand.u32 %v2099, 4294901760
        %2679 = vmatpush.msra.mxu0 %v2678
        %v2680 = vand.u32 %v2045, 4294901760
        %2681 = vmatpush.msra.mxu0 %v2680
        %v2682 = vand.u32 %v2044, 4294901760
        %2683 = vmatpush.msra.mxu0 %v2682
        %v2684 = vand.u32 %v2043, 4294901760
        %2685 = vmatpush.msra.mxu0 %v2684
        %v2686 = vand.u32 %v2050, 4294901760
        %2687 = vmatmul.f32.gmra.mxu0 %v2686
        %v2688 = vpop.f32.mrf.mxu0
        %v2689 = vadd.f32 %v2604, %v2688
        %v2690 = vand.u32 %v2053, 4294901760
        %2691 = vmatmul.f32.gmra.mxu0 %v2690
        %v2692 = vpop.f32.mrf.mxu0
        %v2693 = vadd.f32 %v2608, %v2692
        %v2694 = vand.u32 %v2056, 4294901760
        %2695 = vmatmul.f32.gmra.mxu0 %v2694
        %v2696 = vpop.f32.mrf.mxu0
        %v2697 = vadd.f32 %v2612, %v2696
        %v2698 = vand.u32 %v2059, 4294901760
        %2699 = vmatmul.f32.gmra.mxu0 %v2698
        %v2700 = vpop.f32.mrf.mxu0
        %v2701 = vadd.f32 %v2616, %v2700
        %v2702 = vand.u32 %v2062, 4294901760
        %2703 = vmatmul.f32.gmra.mxu0 %v2702
        %v2704 = vpop.f32.mrf.mxu0
        %v2705 = vadd.f32 %v2620, %v2704
        %v2706 = vand.u32 %v2065, 4294901760
        %2707 = vmatmul.f32.gmra.mxu0 %v2706
        %v2708 = vpop.f32.mrf.mxu0
        %v2709 = vadd.f32 %v2624, %v2708
        %v2710 = vand.u32 %v2068, 4294901760
        %2711 = vmatmul.f32.gmra.mxu0 %v2710
        %v2712 = vpop.f32.mrf.mxu0
        %v2713 = vadd.f32 %v2628, %v2712
        %v2714 = vand.u32 %v2071, 4294901760
        %2715 = vmatmul.f32.gmra.mxu0 %v2714
        %v2716 = vpop.f32.mrf.mxu0
        %v2717 = vadd.f32 %v2632, %v2716
        %v2718 = vand.u32 %v2074, 4294901760
        %2719 = vmatmul.f32.gmra.mxu0 %v2718
        %v2720 = vpop.f32.mrf.mxu0
        %v2721 = vadd.f32 %v2636, %v2720
        %v2722 = vand.u32 %v2077, 4294901760
        %2723 = vmatmul.f32.gmra.mxu0 %v2722
        %v2724 = vpop.f32.mrf.mxu0
        %v2725 = vadd.f32 %v2640, %v2724
        %v2726 = vand.u32 %v2080, 4294901760
        %2727 = vmatmul.f32.gmra.mxu0 %v2726
        %v2728 = vpop.f32.mrf.mxu0
        %v2729 = vadd.f32 %v2644, %v2728
        %v2730 = vand.u32 %v2083, 4294901760
        %2731 = vmatmul.f32.gmra.mxu0 %v2730
        %v2732 = vpop.f32.mrf.mxu0
        %v2733 = vadd.f32 %v2648, %v2732
        %v2734 = vand.u32 %v2086, 4294901760
        %2735 = vmatmul.f32.gmra.mxu0 %v2734
        %v2736 = vpop.f32.mrf.mxu0
        %v2737 = vadd.f32 %v2652, %v2736
        %v2738 = vand.u32 %v2089, 4294901760
        %2739 = vmatmul.f32.gmra.mxu0 %v2738
        %v2740 = vpop.f32.mrf.mxu0
        %v2741 = vadd.f32 %v2656, %v2740
        %v2742 = vand.u32 %v2092, 4294901760
        %2743 = vmatmul.f32.gmra.mxu0 %v2742
        %v2744 = vpop.f32.mrf.mxu0
        %v2745 = vadd.f32 %v2660, %v2744
        %v2746 = vand.u32 %v2095, 4294901760
        %2747 = vmatmul.f32.gmra.mxu0 %v2746
        %v2748 = vpop.f32.mrf.mxu0
        %v2749 = vadd.f32 %v2664, %v2748
        %2750 = vdwg.mxu0
        %v2751 = vsub.f32 0.0, %v2689
        %v2752 = vsub.f32 0.0, %v2693
        %v2753 = vsub.f32 0.0, %v2697
        %v2754 = vsub.f32 0.0, %v2701
        %v2755 = vsub.f32 0.0, %v2705
        %v2756 = vsub.f32 0.0, %v2709
        %v2757 = vsub.f32 0.0, %v2713
        %v2758 = vsub.f32 0.0, %v2717
        %v2759 = vsub.f32 0.0, %v2721
        %v2760 = vsub.f32 0.0, %v2725
        %v2761 = vsub.f32 0.0, %v2729
        %v2762 = vsub.f32 0.0, %v2733
        %v2763 = vsub.f32 0.0, %v2737
        %v2764 = vsub.f32 0.0, %v2741
        %v2765 = vsub.f32 0.0, %v2745
        %v2766 = vsub.f32 0.0, %v2749
        %v2767 = vmul.f32 %v2751, 1.442695
        %v2768 = vpow.pop %v2767
        %v2769 = vmul.f32 %v2752, 1.442695
        %v2770 = vpow.pop %v2769
        %v2771 = vmul.f32 %v2753, 1.442695
        %v2772 = vpow.pop %v2771
        %v2773 = vmul.f32 %v2754, 1.442695
        %v2774 = vpow.pop %v2773
        %v2775 = vmul.f32 %v2755, 1.442695
        %v2776 = vpow.pop %v2775
        %v2777 = vmul.f32 %v2756, 1.442695
        %v2778 = vpow.pop %v2777
        %v2779 = vmul.f32 %v2757, 1.442695
        %v2780 = vpow.pop %v2779
        %v2781 = vmul.f32 %v2758, 1.442695
        %v2782 = vpow.pop %v2781
        %v2783 = vmul.f32 %v2759, 1.442695
        %v2784 = vpow.pop %v2783
        %v2785 = vmul.f32 %v2760, 1.442695
        %v2786 = vpow.pop %v2785
        %v2787 = vmul.f32 %v2761, 1.442695
        %v2788 = vpow.pop %v2787
        %v2789 = vmul.f32 %v2762, 1.442695
        %v2790 = vpow.pop %v2789
        %v2791 = vmul.f32 %v2763, 1.442695
        %v2792 = vpow.pop %v2791
        %v2793 = vmul.f32 %v2764, 1.442695
        %v2794 = vpow.pop %v2793
        %v2795 = vmul.f32 %v2765, 1.442695
        %v2796 = vpow.pop %v2795
        %v2797 = vmul.f32 %v2766, 1.442695
        %v2798 = vpow.pop %v2797
        %v2799 = vadd.f32 %v2768, 1.0
        %v2800 = vadd.f32 %v2770, 1.0
        %v2801 = vadd.f32 %v2772, 1.0
        %v2802 = vadd.f32 %v2774, 1.0
        %v2803 = vadd.f32 %v2776, 1.0
        %v2804 = vadd.f32 %v2778, 1.0
        %v2805 = vadd.f32 %v2780, 1.0
        %v2806 = vadd.f32 %v2782, 1.0
        %v2807 = vadd.f32 %v2784, 1.0
        %v2808 = vadd.f32 %v2786, 1.0
        %v2809 = vadd.f32 %v2788, 1.0
        %v2810 = vadd.f32 %v2790, 1.0
        %v2811 = vadd.f32 %v2792, 1.0
        %v2812 = vadd.f32 %v2794, 1.0
        %v2813 = vadd.f32 %v2796, 1.0
        %v2814 = vadd.f32 %v2798, 1.0
        %v2815 = vrcp.pop %v2799
        %v2816 = vmul.f32 %v2799, %v2815
        %v2817 = vsub.f32 1.0, %v2816
        %v2818 = vmul.f32 %v2815, %v2817
        %v2819 = vadd.f32 %v2815, %v2818
        %vm2820 = vweird.f32 %v2799
        %vm2821 = vweird.f32 %v2815
        %vm2822 = vmor %vm2820, %vm2821
        %v2823 = vsel %vm2822, %v2815, %v2819
        %v2824 = vand.u32 2147483647, %v2799
        %vm2825 = vcmp.eq.f32.partialorder %v2824, 8.507059e+37
        %v2826 = vand.u32 %v2799, 2147483648
        %v2827 = vor.u32 1.1754944e-38, %v2826
        %v2828 = vsel %vm2825, %v2827, %v2823
        %v2829 = vmul.f32 1.0, %v2828
        %v2830 = vrcp.pop %v2800
        %v2831 = vmul.f32 %v2800, %v2830
        %v2832 = vsub.f32 1.0, %v2831
        %v2833 = vmul.f32 %v2830, %v2832
        %v2834 = vadd.f32 %v2830, %v2833
        %vm2835 = vweird.f32 %v2800
        %vm2836 = vweird.f32 %v2830
        %vm2837 = vmor %vm2835, %vm2836
        %v2838 = vsel %vm2837, %v2830, %v2834
        %v2839 = vand.u32 2147483647, %v2800
        %vm2840 = vcmp.eq.f32.partialorder %v2839, 8.507059e+37
        %v2841 = vand.u32 %v2800, 2147483648
        %v2842 = vor.u32 1.1754944e-38, %v2841
        %v2843 = vsel %vm2840, %v2842, %v2838
        %v2844 = vmul.f32 1.0, %v2843
        %v2845 = vrcp.pop %v2801
        %v2846 = vmul.f32 %v2801, %v2845
        %v2847 = vsub.f32 1.0, %v2846
        %v2848 = vmul.f32 %v2845, %v2847
        %v2849 = vadd.f32 %v2845, %v2848
        %vm2850 = vweird.f32 %v2801
        %vm2851 = vweird.f32 %v2845
        %vm2852 = vmor %vm2850, %vm2851
        %v2853 = vsel %vm2852, %v2845, %v2849
        %v2854 = vand.u32 2147483647, %v2801
        %vm2855 = vcmp.eq.f32.partialorder %v2854, 8.507059e+37
        %v2856 = vand.u32 %v2801, 2147483648
        %v2857 = vor.u32 1.1754944e-38, %v2856
        %v2858 = vsel %vm2855, %v2857, %v2853
        %v2859 = vmul.f32 1.0, %v2858
        %v2860 = vrcp.pop %v2802
        %v2861 = vmul.f32 %v2802, %v2860
        %v2862 = vsub.f32 1.0, %v2861
        %v2863 = vmul.f32 %v2860, %v2862
        %v2864 = vadd.f32 %v2860, %v2863
        %vm2865 = vweird.f32 %v2802
        %vm2866 = vweird.f32 %v2860
        %vm2867 = vmor %vm2865, %vm2866
        %v2868 = vsel %vm2867, %v2860, %v2864
        %v2869 = vand.u32 2147483647, %v2802
        %vm2870 = vcmp.eq.f32.partialorder %v2869, 8.507059e+37
        %v2871 = vand.u32 %v2802, 2147483648
        %v2872 = vor.u32 1.1754944e-38, %v2871
        %v2873 = vsel %vm2870, %v2872, %v2868
        %v2874 = vmul.f32 1.0, %v2873
        %v2875 = vrcp.pop %v2803
        %v2876 = vmul.f32 %v2803, %v2875
        %v2877 = vsub.f32 1.0, %v2876
        %v2878 = vmul.f32 %v2875, %v2877
        %v2879 = vadd.f32 %v2875, %v2878
        %vm2880 = vweird.f32 %v2803
        %vm2881 = vweird.f32 %v2875
        %vm2882 = vmor %vm2880, %vm2881
        %v2883 = vsel %vm2882, %v2875, %v2879
        %v2884 = vand.u32 2147483647, %v2803
        %vm2885 = vcmp.eq.f32.partialorder %v2884, 8.507059e+37
        %v2886 = vand.u32 %v2803, 2147483648
        %v2887 = vor.u32 1.1754944e-38, %v2886
        %v2888 = vsel %vm2885, %v2887, %v2883
        %v2889 = vmul.f32 1.0, %v2888
        %v2890 = vrcp.pop %v2804
        %v2891 = vmul.f32 %v2804, %v2890
        %v2892 = vsub.f32 1.0, %v2891
        %v2893 = vmul.f32 %v2890, %v2892
        %v2894 = vadd.f32 %v2890, %v2893
        %vm2895 = vweird.f32 %v2804
        %vm2896 = vweird.f32 %v2890
        %vm2897 = vmor %vm2895, %vm2896
        %v2898 = vsel %vm2897, %v2890, %v2894
        %v2899 = vand.u32 2147483647, %v2804
        %vm2900 = vcmp.eq.f32.partialorder %v2899, 8.507059e+37
        %v2901 = vand.u32 %v2804, 2147483648
        %v2902 = vor.u32 1.1754944e-38, %v2901
        %v2903 = vsel %vm2900, %v2902, %v2898
        %v2904 = vmul.f32 1.0, %v2903
        %v2905 = vrcp.pop %v2805
        %v2906 = vmul.f32 %v2805, %v2905
        %v2907 = vsub.f32 1.0, %v2906
        %v2908 = vmul.f32 %v2905, %v2907
        %v2909 = vadd.f32 %v2905, %v2908
        %vm2910 = vweird.f32 %v2805
        %vm2911 = vweird.f32 %v2905
        %vm2912 = vmor %vm2910, %vm2911
        %v2913 = vsel %vm2912, %v2905, %v2909
        %v2914 = vand.u32 2147483647, %v2805
        %vm2915 = vcmp.eq.f32.partialorder %v2914, 8.507059e+37
        %v2916 = vand.u32 %v2805, 2147483648
        %v2917 = vor.u32 1.1754944e-38, %v2916
        %v2918 = vsel %vm2915, %v2917, %v2913
        %v2919 = vmul.f32 1.0, %v2918
        %v2920 = vrcp.pop %v2806
        %v2921 = vmul.f32 %v2806, %v2920
        %v2922 = vsub.f32 1.0, %v2921
        %v2923 = vmul.f32 %v2920, %v2922
        %v2924 = vadd.f32 %v2920, %v2923
        %vm2925 = vweird.f32 %v2806
        %vm2926 = vweird.f32 %v2920
        %vm2927 = vmor %vm2925, %vm2926
        %v2928 = vsel %vm2927, %v2920, %v2924
        %v2929 = vand.u32 2147483647, %v2806
        %vm2930 = vcmp.eq.f32.partialorder %v2929, 8.507059e+37
        %v2931 = vand.u32 %v2806, 2147483648
        %v2932 = vor.u32 1.1754944e-38, %v2931
        %v2933 = vsel %vm2930, %v2932, %v2928
        %v2934 = vmul.f32 1.0, %v2933
        %v2935 = vrcp.pop %v2807
        %v2936 = vmul.f32 %v2807, %v2935
        %v2937 = vsub.f32 1.0, %v2936
        %v2938 = vmul.f32 %v2935, %v2937
        %v2939 = vadd.f32 %v2935, %v2938
        %vm2940 = vweird.f32 %v2807
        %vm2941 = vweird.f32 %v2935
        %vm2942 = vmor %vm2940, %vm2941
        %v2943 = vsel %vm2942, %v2935, %v2939
        %v2944 = vand.u32 2147483647, %v2807
        %vm2945 = vcmp.eq.f32.partialorder %v2944, 8.507059e+37
        %v2946 = vand.u32 %v2807, 2147483648
        %v2947 = vor.u32 1.1754944e-38, %v2946
        %v2948 = vsel %vm2945, %v2947, %v2943
        %v2949 = vmul.f32 1.0, %v2948
        %v2950 = vrcp.pop %v2808
        %v2951 = vmul.f32 %v2808, %v2950
        %v2952 = vsub.f32 1.0, %v2951
        %v2953 = vmul.f32 %v2950, %v2952
        %v2954 = vadd.f32 %v2950, %v2953
        %vm2955 = vweird.f32 %v2808
        %vm2956 = vweird.f32 %v2950
        %vm2957 = vmor %vm2955, %vm2956
        %v2958 = vsel %vm2957, %v2950, %v2954
        %v2959 = vand.u32 2147483647, %v2808
        %vm2960 = vcmp.eq.f32.partialorder %v2959, 8.507059e+37
        %v2961 = vand.u32 %v2808, 2147483648
        %v2962 = vor.u32 1.1754944e-38, %v2961
        %v2963 = vsel %vm2960, %v2962, %v2958
        %v2964 = vmul.f32 1.0, %v2963
        %v2965 = vrcp.pop %v2809
        %v2966 = vmul.f32 %v2809, %v2965
        %v2967 = vsub.f32 1.0, %v2966
        %v2968 = vmul.f32 %v2965, %v2967
        %v2969 = vadd.f32 %v2965, %v2968
        %vm2970 = vweird.f32 %v2809
        %vm2971 = vweird.f32 %v2965
        %vm2972 = vmor %vm2970, %vm2971
        %v2973 = vsel %vm2972, %v2965, %v2969
        %v2974 = vand.u32 2147483647, %v2809
        %vm2975 = vcmp.eq.f32.partialorder %v2974, 8.507059e+37
        %v2976 = vand.u32 %v2809, 2147483648
        %v2977 = vor.u32 1.1754944e-38, %v2976
        %v2978 = vsel %vm2975, %v2977, %v2973
        %v2979 = vmul.f32 1.0, %v2978
        %v2980 = vrcp.pop %v2810
        %v2981 = vmul.f32 %v2810, %v2980
        %v2982 = vsub.f32 1.0, %v2981
        %v2983 = vmul.f32 %v2980, %v2982
        %v2984 = vadd.f32 %v2980, %v2983
        %vm2985 = vweird.f32 %v2810
        %vm2986 = vweird.f32 %v2980
        %vm2987 = vmor %vm2985, %vm2986
        %v2988 = vsel %vm2987, %v2980, %v2984
        %v2989 = vand.u32 2147483647, %v2810
        %vm2990 = vcmp.eq.f32.partialorder %v2989, 8.507059e+37
        %v2991 = vand.u32 %v2810, 2147483648
        %v2992 = vor.u32 1.1754944e-38, %v2991
        %v2993 = vsel %vm2990, %v2992, %v2988
        %v2994 = vmul.f32 1.0, %v2993
        %v2995 = vrcp.pop %v2811
        %v2996 = vmul.f32 %v2811, %v2995
        %v2997 = vsub.f32 1.0, %v2996
        %v2998 = vmul.f32 %v2995, %v2997
        %v2999 = vadd.f32 %v2995, %v2998
        %vm3000 = vweird.f32 %v2811
        %vm3001 = vweird.f32 %v2995
        %vm3002 = vmor %vm3000, %vm3001
        %v3003 = vsel %vm3002, %v2995, %v2999
        %v3004 = vand.u32 2147483647, %v2811
        %vm3005 = vcmp.eq.f32.partialorder %v3004, 8.507059e+37
        %v3006 = vand.u32 %v2811, 2147483648
        %v3007 = vor.u32 1.1754944e-38, %v3006
        %v3008 = vsel %vm3005, %v3007, %v3003
        %v3009 = vmul.f32 1.0, %v3008
        %v3010 = vrcp.pop %v2812
        %v3011 = vmul.f32 %v2812, %v3010
        %v3012 = vsub.f32 1.0, %v3011
        %v3013 = vmul.f32 %v3010, %v3012
        %v3014 = vadd.f32 %v3010, %v3013
        %vm3015 = vweird.f32 %v2812
        %vm3016 = vweird.f32 %v3010
        %vm3017 = vmor %vm3015, %vm3016
        %v3018 = vsel %vm3017, %v3010, %v3014
        %v3019 = vand.u32 2147483647, %v2812
        %vm3020 = vcmp.eq.f32.partialorder %v3019, 8.507059e+37
        %v3021 = vand.u32 %v2812, 2147483648
        %v3022 = vor.u32 1.1754944e-38, %v3021
        %v3023 = vsel %vm3020, %v3022, %v3018
        %v3024 = vmul.f32 1.0, %v3023
        %v3025 = vrcp.pop %v2813
        %v3026 = vmul.f32 %v2813, %v3025
        %v3027 = vsub.f32 1.0, %v3026
        %v3028 = vmul.f32 %v3025, %v3027
        %v3029 = vadd.f32 %v3025, %v3028
        %vm3030 = vweird.f32 %v2813
        %vm3031 = vweird.f32 %v3025
        %vm3032 = vmor %vm3030, %vm3031
        %v3033 = vsel %vm3032, %v3025, %v3029
        %v3034 = vand.u32 2147483647, %v2813
        %vm3035 = vcmp.eq.f32.partialorder %v3034, 8.507059e+37
        %v3036 = vand.u32 %v2813, 2147483648
        %v3037 = vor.u32 1.1754944e-38, %v3036
        %v3038 = vsel %vm3035, %v3037, %v3033
        %v3039 = vmul.f32 1.0, %v3038
        %v3040 = vrcp.pop %v2814
        %v3041 = vmul.f32 %v2814, %v3040
        %v3042 = vsub.f32 1.0, %v3041
        %v3043 = vmul.f32 %v3040, %v3042
        %v3044 = vadd.f32 %v3040, %v3043
        %vm3045 = vweird.f32 %v2814
        %vm3046 = vweird.f32 %v3040
        %vm3047 = vmor %vm3045, %vm3046
        %v3048 = vsel %vm3047, %v3040, %v3044
        %v3049 = vand.u32 2147483647, %v2814
        %vm3050 = vcmp.eq.f32.partialorder %v3049, 8.507059e+37
        %v3051 = vand.u32 %v2814, 2147483648
        %v3052 = vor.u32 1.1754944e-38, %v3051
        %v3053 = vsel %vm3050, %v3052, %v3048
        %v3054 = vmul.f32 1.0, %v3053
        %vm3055 = vcmask 64512
        %3056 = vst.msk [vmem:[%s186] sm:$0xff] %vm3055, %v2829
        %3057 = vst.msk [vmem:[%s186 + $0x8] sm:$0xff] %vm3055, %v2844
        %3058 = vst.msk [vmem:[%s186 + $0x10] sm:$0xff] %vm3055, %v2859
        %3059 = vst.msk [vmem:[%s186 + $0x18] sm:$0xff] %vm3055, %v2874
        %3060 = vst.msk [vmem:[%s186 + $0x20] sm:$0xff] %vm3055, %v2889
        %3061 = vst.msk [vmem:[%s186 + $0x28] sm:$0xff] %vm3055, %v2904
        %3062 = vst.msk [vmem:[%s186 + $0x30] sm:$0xff] %vm3055, %v2919
        %3063 = vst.msk [vmem:[%s186 + $0x38] sm:$0xff] %vm3055, %v2934
        %3064 = vst.msk [vmem:[%s186 + $0x40] sm:$0xff] %vm3055, %v2949
        %3065 = vst.msk [vmem:[%s186 + $0x48] sm:$0xff] %vm3055, %v2964
        %3066 = vst.msk [vmem:[%s186 + $0x50] sm:$0xff] %vm3055, %v2979
        %3067 = vst.msk [vmem:[%s186 + $0x58] sm:$0xff] %vm3055, %v2994
        %3068 = vst.msk [vmem:[%s186 + $0x60] sm:$0xff] %vm3055, %v3009
        %3069 = vst.msk [vmem:[%s186 + $0x68] sm:$0xff] %vm3055, %v3024
        %3070 = vst.msk [vmem:[%s186 + $0x70] sm:$0xff] %vm3055, %v3039
        %3071 = vst.msk [vmem:[%s186 + $0x78] sm:$0xff] %vm3055, %v3054
        %s3072 = smul.u32 16, %s15
        %p3073 = scmp.lt.s32.totalorder %s3072, 31
        %s3074 = scalar_select %p3073, %s3072, 31
        %s3075 = smul.addr %s3074, 8
        %s3076 = scalar_lea.vmem %s3, %s3075
        // Predicated region
        $region37: #{conv_forward.1} parent=31 // pred_check
          %p3077 = pneg %p101
        $region38: #{conv_forward.1} parent=31 // pred_check_branch
          %3079 = sbr.rel (%p3077) target = $region40
        $region39: #{conv_forward.1} parent=31 // pred_region
          %s3080 = smul.u32 16, %s15
        $region40: #{conv_forward.1} parent=31 // pred_fallthru
          _
      $region32: #{conv_forward.1} parent=5 // pred_fallthru
        _
      %p3081 = scmp.le.s32.totalorder 2, %s10
      // Predicated region
      $region41: #{conv_forward.1} parent=5 // pred_check
        %p3082 = pneg %p3081
      $region42: #{conv_forward.1} parent=5 // pred_check_branch
        %3084 = sbr.rel (%p3082) target = $region44
      $region43: #{conv_forward.1} parent=5 // pred_region
        %s3085 = ssub.s32 %s10, 2
        // Predicated region
        $region45: #{conv_forward.1} parent=43 // pred_check
          %p3086 = pneg %p107
        $region46: #{conv_forward.1} parent=43 // pred_check_branch
          %3088 = sbr.rel (%p3086) target = $region48
        $region47: #{conv_forward.1} parent=43 // pred_region
          %s3089 = smul.u32 16, %s16
          %p3090 = scmp.lt.s32.totalorder %s3089, 31
          %s3091 = scalar_select %p3090, %s3089, 31
          %s3092 = smul.addr %s3091, 8
          %s3093 = scalar_lea.vmem %s3, %s3092
        $region48: #{conv_forward.1} parent=43 // pred_fallthru
          _
      $region44: #{conv_forward.1} parent=5 // pred_fallthru
        _
    $region6: #{conv_forward.1} parent=1 // loop_footer
      %s14 = sadd.s32 1, %s10
    $region7: #{conv_forward.1} parent=1 // loop_footer_branch
      %9 = sbr.rel target = $region3
    $region8: #{conv_forward.1} parent=1 // loop_exit
      _
    %3094 = vsyncpa [#allocation3], 1
    %s3095 = scalar_lea.sflag [#allocation3], 1
    %3096 = vsyncpa %s3095, 1

</llo_original>
